<compile_context>
chip_gen: v7x
topology: tpu7x:2x2x1
jax: 0.10.0
libtpu: 0.0.40
codegen_flags: <defaults>
</compile_context>

<pallas_src>
import functools

import jax
import jax.numpy as jnp
import numpy as np
from jax import lax
from jax.experimental import pallas as pl
from jax.experimental.pallas import tpu as pltpu


# ----------------------------------------------------------------------------
# Pallas kernel: one frame per grid step, fully fused attention block
# ----------------------------------------------------------------------------
def _wan_attn_block_kernel(x_ref, g_ref, wqkv_ref, wp_ref, bqkv_ref, bp_ref,
                           o_ref, q_s, k_s, v_s, *, tile_q, n_tiles):
    # x_ref    : (L, C)   one frame, channels-last (C on lanes)
    # g_ref    : (1, C)   RMS-norm gamma (f32)
    # wqkv_ref : (C, 3C)  fused qkv weight, pre-transposed, bf16 (q cols pre-scaled)
    # wp_ref   : (C, C)   proj weight, pre-transposed, bf16
    # bqkv_ref : (1, 3C)  fused qkv bias (q part pre-scaled), f32
    # bp_ref   : (1, C)   proj bias, f32
    # o_ref    : (L, C)   output frame (proj(attn) + identity)
    # q_s/k_s/v_s : (L, C) bf16 VMEM scratch
    L, C = x_ref.shape

    # ---- Prologue (per frame): RMS-norm + fused 1x1-conv qkv projection ----
    x = x_ref[...].astype(jnp.float32)                      # (L, C) f32
    ssq = jnp.sum(x * x, axis=-1, keepdims=True)
    inv = lax.rsqrt(jnp.maximum(ssq, 1e-24))                # == 1/max(||x||, 1e-12)
    xn = x * (inv * (float(C) ** 0.5)) * g_ref[...].astype(jnp.float32)
    xn = xn.astype(jnp.bfloat16)                            # bf16 MXU operand

    qkv = jnp.dot(xn, wqkv_ref[...], preferred_element_type=jnp.float32)
    qkv = qkv + bqkv_ref[...].astype(jnp.float32)           # (L, 3C); scale folded into q
    q_s[...] = qkv[:, 0:C].astype(jnp.bfloat16)
    k_s[...] = qkv[:, C:2 * C].astype(jnp.bfloat16)
    v_s[...] = qkv[:, 2 * C:3 * C].astype(jnp.bfloat16)

    wp = wp_ref[...]                                        # (C, C) bf16
    bp = bp_ref[...].astype(jnp.float32)                    # (1, C) f32

    # ---- single-head attention + proj + residual, tiled over query rows ----
    def q_tile(lo):
        qt = q_s[pl.ds(lo, tile_q), :]                      # (tq, C) bf16
        # NT matmul: contract the lane dim of both q and k (K never transposed).
        s = lax.dot_general(qt, k_s[...], (((1,), (1,)), ((), ())),
                            preferred_element_type=jnp.float32)   # (tq, L) f32
        m = jnp.max(s, axis=-1, keepdims=True)
        p = jnp.exp(s - m)                                  # softmax kept in f32 (v5e)
        inv_den = pl.reciprocal(jnp.sum(p, axis=-1, keepdims=True), approx=True)
        o = jnp.dot(p.astype(jnp.bfloat16), v_s[...],
                    preferred_element_type=jnp.float32) * inv_den       # (tq, C)
        y = jnp.dot(o.astype(jnp.bfloat16), wp,
                    preferred_element_type=jnp.float32) + bp            # proj
        resid = x_ref[pl.ds(lo, tile_q), :].astype(jnp.float32)
        o_ref[pl.ds(lo, tile_q), :] = (y + resid).astype(o_ref.dtype)

    if n_tiles == 1:
        q_tile(0)
    else:
        def body(qi, carry):
            q_tile(pl.multiple_of(qi * tile_q, tile_q))
            return carry
        lax.fori_loop(0, n_tiles, body, 0)


def _pick_q_tile(L, target):
    """Largest divisor of L <= target, preferring multiples of 128, then 8."""
    if L <= target:
        return L
    divisors = [t for t in range(1, min(target, L) + 1) if L % t == 0]
    for mod in (128, 8, 1):
        cands = [t for t in divisors if t % mod == 0]
        if cands:
            return max(cands)
    return L


# ----------------------------------------------------------------------------
# pallas_call wrapper
# ----------------------------------------------------------------------------
def wan_attention_block_frames(frames, gamma, wqkv_t, wp_t, bqkv, bp,
                               *, q_tile_target=128):
    # frames: (N, L, C) channels-last frames (N = batch * time, L = H * W)
    N, L, C = frames.shape
    tq = _pick_q_tile(L, q_tile_target)
    n_tiles = L // tq
    kernel = functools.partial(_wan_attn_block_kernel, tile_q=tq, n_tiles=n_tiles)

    frame_spec = pl.BlockSpec((None, L, C), lambda n: (n, 0, 0))   # leading dim squeezed
    wqkv_spec = pl.BlockSpec((C, 3 * C), lambda n: (0, 0))
    wp_spec = pl.BlockSpec((C, C), lambda n: (0, 0))
    g_spec = pl.BlockSpec((1, C), lambda n: (0, 0))
    bqkv_spec = pl.BlockSpec((1, 3 * C), lambda n: (0, 0))
    bp_spec = pl.BlockSpec((1, C), lambda n: (0, 0))

    # VMEM budget derived from actual blocks + scratch (+ headroom).
    bx = frames.dtype.itemsize
    vmem_bytes = (
        4 * L * C * bx                      # in + out frame blocks, double-buffered
        + 2 * (3 * C * C + C * C) * 2       # bf16 weights, double-buffered
        + 2 * (C + 3 * C + C) * 4           # gamma + biases (f32), double-buffered
        + 3 * L * C * 2                     # q/k/v bf16 scratch
        + (2 * L * C + L * 3 * C) * 4       # prologue f32 temporaries (x/xn, qkv)
        + 3 * tq * L * 4                    # score / softmax f32 tiles
        + (4 << 20)                         # headroom for relayouts / spills
    )
    vmem_bytes = int(min(vmem_bytes, 64 << 20))

    return pl.pallas_call(
        kernel,
        out_shape=jax.ShapeDtypeStruct((N, L, C), frames.dtype),
        grid=(N,),
        in_specs=[
            frame_spec,                     # x
            g_spec,                         # gamma
            wqkv_spec,                      # fused [Wq*scale | Wk | Wv]^T (bf16)
            wp_spec,                        # Wproj^T (bf16)
            bqkv_spec,                      # fused [bq*scale | bk | bv]
            bp_spec,                        # bproj
        ],
        out_specs=frame_spec,
        scratch_shapes=[
            pltpu.VMEM((L, C), jnp.bfloat16),   # q
            pltpu.VMEM((L, C), jnp.bfloat16),   # k
            pltpu.VMEM((L, C), jnp.bfloat16),   # v
        ],
        compiler_params=pltpu.CompilerParams(
            dimension_semantics=("parallel",),
            vmem_limit_bytes=vmem_bytes),
    )(frames, gamma, wqkv_t, wp_t, bqkv, bp)


# ----------------------------------------------------------------------------
# Module wrapper (layout glue only)
# ----------------------------------------------------------------------------
class WanAttentionBlockPallas:
    """Pallas TPU implementation of diffusers WanAttentionBlock.forward."""

    def __init__(self, dim, key=None):
        self.dim = dim
        if key is None:
            key = jax.random.PRNGKey(0)
        kg, kw1, kb1, kw2, kb2 = jax.random.split(key, 5)
        # PyTorch parameter layouts: gamma (dim,1,1); to_qkv.weight (3*dim, dim, 1, 1);
        # proj.weight (dim, dim, 1, 1).  Stored squeezed, in f32 (reference copies).
        self.gamma = 1.0 + 0.1 * jax.random.normal(kg, (dim,), jnp.float32)
        self.w_qkv = 0.05 * jax.random.normal(kw1, (3 * dim, dim), jnp.float32)
        self.b_qkv = 0.05 * jax.random.normal(kb1, (3 * dim,), jnp.float32)
        self.w_proj = 0.05 * jax.random.normal(kw2, (dim, dim), jnp.float32)
        self.b_proj = 0.05 * jax.random.normal(kb2, (dim,), jnp.float32)

        scale = 1.0 / (float(dim) ** 0.5)       # SDPA scale, folded into Wq / bq
        wq_t = jnp.transpose(self.w_qkv[0 * dim:1 * dim]) * scale
        wk_t = jnp.transpose(self.w_qkv[1 * dim:2 * dim])
        wv_t = jnp.transpose(self.w_qkv[2 * dim:3 * dim])
        # Fused (Cin, 3*Cout) weight, bf16 MXU operands (f32 accumulate in-kernel).
        self._wqkv_t = jnp.concatenate([wq_t, wk_t, wv_t], axis=1).astype(jnp.bfloat16)
        self._wp_t = jnp.transpose(self.w_proj).astype(jnp.bfloat16)
        bq = self.b_qkv[0 * dim:1 * dim] * scale
        bk = self.b_qkv[1 * dim:2 * dim]
        bv = self.b_qkv[2 * dim:3 * dim]
        self._bqkv = jnp.concatenate([bq, bk, bv]).reshape(1, 3 * dim).astype(jnp.float32)
        self._bp = self.b_proj.reshape(1, dim).astype(jnp.float32)
        self._g = self.gamma.reshape(1, dim).astype(jnp.float32)
        # NOTE: F.scaled_dot_product_attention is called without is_causal,
        # so no causal mask is applied (matches the PyTorch forward).
        # TODO(synk): for C < 128 (lane under-utilization) batch several frames per
        # block / pad the lane dim; left as-is since real WAN uses C = 384.

    def __call__(self, x):
        # x: (b, c, t, h, w)  -- PyTorch NCTHW convention
        b, c, t, h, w = x.shape
        assert c == self.dim
        L = h * w
        frames = jnp.transpose(x, (0, 2, 3, 4, 1)).reshape(b * t, L, c)
        y = wan_attention_block_frames(
            frames, self._g, self._wqkv_t, self._wp_t, self._bqkv, self._bp)
        y = y.reshape(b, t, h, w, c)
        return jnp.transpose(y, (0, 4, 1, 2, 3))            # (b, c, t, h, w)


# ----------------------------------------------------------------------------
# Pure-JAX reference (mirrors the PyTorch forward, f32 HIGHEST precision)
# ----------------------------------------------------------------------------
def _ref_forward(x, gamma, w_qkv, b_qkv, w_proj, b_proj):
    b, c, t, h, w = x.shape
    hp = jax.lax.Precision.HIGHEST
    xf = jnp.transpose(x, (0, 2, 1, 3, 4)).reshape(b * t, c, h, w)
    nrm = jnp.maximum(jnp.sqrt(jnp.sum(xf * xf, axis=1, keepdims=True)), 1e-12)
    xn = xf / nrm * (c ** 0.5) * gamma[None, :, None, None]
    qkv = jnp.einsum('oc,nchw->nohw', w_qkv, xn, precision=hp) \
        + b_qkv[None, :, None, None]
    qkv = jnp.transpose(qkv.reshape(b * t, 3 * c, h * w), (0, 2, 1))   # (N, L, 3C)
    q, k, v = jnp.split(qkv, 3, axis=-1)
    s = jnp.einsum('nqc,nkc->nqk', q, k, precision=hp) / (c ** 0.5)
    p = jax.nn.softmax(s, axis=-1)
    o = jnp.einsum('nqk,nkc->nqc', p, v, precision=hp)
    y = jnp.einsum('oc,nlc->nlo', w_proj, o, precision=hp) + b_proj[None, None, :]
    y = jnp.transpose(y, (0, 2, 1)).reshape(b, t, c, h, w)
    y = jnp.transpose(y, (0, 2, 1, 3, 4))
    return y + x


if __name__ == "__main__":
    key = jax.random.PRNGKey(0)
    kx, kp = jax.random.split(key)
    b, dim, t, h, w = 2, 32, 3, 16, 16
    x = jax.random.normal(kx, (b, dim, t, h, w), jnp.float32)

    block = WanAttentionBlockPallas(dim, key=kp)
    y = jax.block_until_ready(block(x))
    y_ref = jax.block_until_ready(
        _ref_forward(x, block.gamma, block.w_qkv, block.b_qkv,
                     block.w_proj, block.b_proj))

    assert y.shape == y_ref.shape == x.shape, (y.shape, y_ref.shape, x.shape)
    err = float(np.max(np.abs(np.asarray(y) - np.asarray(y_ref))))
    # Tolerance covers bf16 MXU operands + approx reciprocal vs the f32
    # HIGHEST-precision reference.
    assert np.allclose(np.asarray(y), np.asarray(y_ref), atol=3e-2, rtol=3e-2), err
    print("KERNEL_OK")
</pallas_src>

<mosaic_0001>
module attributes {stable_mosaic.version = 11 : i64} {
  func.func @_wan_attn_block_kernel(%arg0: i32, %arg1: memref<1x256x32xf32, #tpu.memory_space<vmem>>, %arg2: memref<1x32xf32, #tpu.memory_space<vmem>>, %arg3: memref<32x96xbf16, #tpu.memory_space<vmem>>, %arg4: memref<32x32xbf16, #tpu.memory_space<vmem>>, %arg5: memref<1x96xf32, #tpu.memory_space<vmem>>, %arg6: memref<1x32xf32, #tpu.memory_space<vmem>>, %arg7: memref<1x256x32xf32, #tpu.memory_space<vmem>>, %arg8: memref<256x32xbf16, #tpu.memory_space<vmem>>, %arg9: memref<256x32xbf16, #tpu.memory_space<vmem>>, %arg10: memref<256x32xbf16, #tpu.memory_space<vmem>>) attributes {dimension_semantics = [#tpu.dimension_semantics<parallel>], iteration_bounds = array<i64: 6>, scalar_prefetch = 0 : i64, scratch_operands = 3 : i64, tpu.core_type = #tpu.core_type<tc>, window_params = [{transform_indices = @transform_0, window_bounds = array<i64: 1, 256, 32>}, {pipeline_mode = #tpu.pipeline_mode<synchronous>, transform_indices = @transform_1, window_bounds = array<i64: 1, 32>}, {pipeline_mode = #tpu.pipeline_mode<synchronous>, transform_indices = @transform_2, window_bounds = array<i64: 32, 96>}, {pipeline_mode = #tpu.pipeline_mode<synchronous>, transform_indices = @transform_3, window_bounds = array<i64: 32, 32>}, {pipeline_mode = #tpu.pipeline_mode<synchronous>, transform_indices = @transform_4, window_bounds = array<i64: 1, 96>}, {pipeline_mode = #tpu.pipeline_mode<synchronous>, transform_indices = @transform_5, window_bounds = array<i64: 1, 32>}, {transform_indices = @transform_6, window_bounds = array<i64: 1, 256, 32>}]} {
    %c0 = arith.constant 0 : index
    %c0_0 = arith.constant 0 : index
    %c0_1 = arith.constant 0 : index
    %0 = vector.load %arg1[%c0, %c0_0, %c0_1] : memref<1x256x32xf32, #tpu.memory_space<vmem>>, vector<1x256x32xf32>
    %1 = vector.shape_cast %0 : vector<1x256x32xf32> to vector<256x32xf32>
    %2 = arith.mulf %1, %1 : vector<256x32xf32>
    %cst = arith.constant dense<0.000000e+00> : vector<256xf32>
    %3 = vector.multi_reduction <add>, %2, %cst [1] : vector<256x32xf32> to vector<256xf32>
    %4 = vector.shape_cast %3 : vector<256xf32> to vector<256x1xf32>
    %cst_2 = arith.constant 1.000000e-24 : f32
    %5 = vector.broadcast %cst_2 : f32 to vector<256x1xf32>
    %6 = arith.maximumf %4, %5 : vector<256x1xf32>
    %7 = math.rsqrt %6 : vector<256x1xf32>
    %cst_3 = arith.constant 5.65685415 : f32
    %8 = vector.broadcast %cst_3 : f32 to vector<256x1xf32>
    %9 = arith.mulf %7, %8 : vector<256x1xf32>
    %10 = vector.broadcast %9 : vector<256x1xf32> to vector<256x32xf32>
    %11 = arith.mulf %1, %10 : vector<256x32xf32>
    %c0_4 = arith.constant 0 : index
    %c0_5 = arith.constant 0 : index
    %12 = vector.load %arg2[%c0_4, %c0_5] : memref<1x32xf32, #tpu.memory_space<vmem>>, vector<1x32xf32>
    %13 = vector.broadcast %12 : vector<1x32xf32> to vector<256x32xf32>
    %14 = arith.mulf %11, %13 : vector<256x32xf32>
    %15 = arith.truncf %14 : vector<256x32xf32> to vector<256x32xbf16>
    %c0_6 = arith.constant 0 : index
    %c0_7 = arith.constant 0 : index
    %16 = vector.load %arg3[%c0_6, %c0_7] : memref<32x96xbf16, #tpu.memory_space<vmem>>, vector<32x96xbf16>
    %cst_8 = arith.constant dense<0.000000e+00> : vector<256x96xf32>
    %17 = tpu.matmul %15, %16, %cst_8 {dimension_numbers = #tpu.dot_dimension_numbers<[1], [0], [0], [1], [0, 0, 1, 1], [], []>} : vector<256x32xbf16>, vector<32x96xbf16>, vector<256x96xf32> -> vector<256x96xf32>
    %c0_9 = arith.constant 0 : index
    %c0_10 = arith.constant 0 : index
    %18 = vector.load %arg5[%c0_9, %c0_10] : memref<1x96xf32, #tpu.memory_space<vmem>>, vector<1x96xf32>
    %19 = vector.broadcast %18 : vector<1x96xf32> to vector<256x96xf32>
    %20 = arith.addf %17, %19 : vector<256x96xf32>
    %21 = vector.extract_strided_slice %20 {offsets = [0, 0], sizes = [256, 32], strides = [1, 1]} : vector<256x96xf32> to vector<256x32xf32>
    %22 = arith.truncf %21 : vector<256x32xf32> to vector<256x32xbf16>
    %c0_11 = arith.constant 0 : index
    %c0_12 = arith.constant 0 : index
    %23 = vector.load %arg8[%c0_11, %c0_12] : memref<256x32xbf16, #tpu.memory_space<vmem>>, vector<256x32xbf16>
    tpu.vector_store %arg8[%c0_11, %c0_12], %22 {strides = array<i32>} : memref<256x32xbf16, #tpu.memory_space<vmem>>, vector<256x32xbf16>,
    %24 = vector.extract_strided_slice %20 {offsets = [0, 32], sizes = [256, 32], strides = [1, 1]} : vector<256x96xf32> to vector<256x32xf32>
    %25 = arith.truncf %24 : vector<256x32xf32> to vector<256x32xbf16>
    %c0_13 = arith.constant 0 : index
    %c0_14 = arith.constant 0 : index
    %26 = vector.load %arg9[%c0_13, %c0_14] : memref<256x32xbf16, #tpu.memory_space<vmem>>, vector<256x32xbf16>
    tpu.vector_store %arg9[%c0_13, %c0_14], %25 {strides = array<i32>} : memref<256x32xbf16, #tpu.memory_space<vmem>>, vector<256x32xbf16>,
    %27 = vector.extract_strided_slice %20 {offsets = [0, 64], sizes = [256, 32], strides = [1, 1]} : vector<256x96xf32> to vector<256x32xf32>
    %28 = arith.truncf %27 : vector<256x32xf32> to vector<256x32xbf16>
    %c0_15 = arith.constant 0 : index
    %c0_16 = arith.constant 0 : index
    %29 = vector.load %arg10[%c0_15, %c0_16] : memref<256x32xbf16, #tpu.memory_space<vmem>>, vector<256x32xbf16>
    tpu.vector_store %arg10[%c0_15, %c0_16], %28 {strides = array<i32>} : memref<256x32xbf16, #tpu.memory_space<vmem>>, vector<256x32xbf16>,
    %c0_17 = arith.constant 0 : index
    %c0_18 = arith.constant 0 : index
    %30 = vector.load %arg4[%c0_17, %c0_18] : memref<32x32xbf16, #tpu.memory_space<vmem>>, vector<32x32xbf16>
    %c0_19 = arith.constant 0 : index
    %c0_20 = arith.constant 0 : index
    %31 = vector.load %arg6[%c0_19, %c0_20] : memref<1x32xf32, #tpu.memory_space<vmem>>, vector<1x32xf32>
    %c0_i32 = arith.constant 0 : i32
    %c2_i32 = arith.constant 2 : i32
    %32 = arith.addi %c0_i32, %c2_i32 : i32
    %c1_i32 = arith.constant 1 : i32
    scf.for %arg11 = %c0_i32 to %32 step %c1_i32  : i32 {
      %c128_i32 = arith.constant 128 : i32
      %33 = arith.muli %arg11, %c128_i32 : i32
      %34 = tpu.assume_multiple %33, 128 : i32
      %35 = arith.index_cast %34 : i32 to index
      %c0_22 = arith.constant 0 : index
      %36 = vector.load %arg8[%35, %c0_22] : memref<256x32xbf16, #tpu.memory_space<vmem>>, vector<128x32xbf16>
      %c0_23 = arith.constant 0 : index
      %c0_24 = arith.constant 0 : index
      %37 = vector.load %arg9[%c0_23, %c0_24] : memref<256x32xbf16, #tpu.memory_space<vmem>>, vector<256x32xbf16>
      %cst_25 = arith.constant dense<0.000000e+00> : vector<128x256xf32>
      %38 = tpu.matmul %36, %37, %cst_25 {dimension_numbers = #tpu.dot_dimension_numbers<[1], [1], [0], [0], [0, 0, 1, 0], [], []>} : vector<128x32xbf16>, vector<256x32xbf16>, vector<128x256xf32> -> vector<128x256xf32>
      %cst_26 = arith.constant dense<0xFF800000> : vector<128xf32>
      %39 = vector.multi_reduction <maximumf>, %38, %cst_26 [1] : vector<128x256xf32> to vector<128xf32>
      %40 = vector.shape_cast %39 : vector<128xf32> to vector<128x1xf32>
      %41 = vector.broadcast %40 : vector<128x1xf32> to vector<128x256xf32>
      %42 = arith.subf %38, %41 : vector<128x256xf32>
      %43 = math.exp %42 : vector<128x256xf32>
      %cst_27 = arith.constant dense<0.000000e+00> : vector<128xf32>
      %44 = vector.multi_reduction <add>, %43, %cst_27 [1] : vector<128x256xf32> to vector<128xf32>
      %45 = vector.shape_cast %44 : vector<128xf32> to vector<128x1xf32>
      %46 = tpu.reciprocal %45 {approx = true} : vector<128x1xf32> -> vector<128x1xf32>
      %47 = arith.truncf %43 : vector<128x256xf32> to vector<128x256xbf16>
      %c0_28 = arith.constant 0 : index
      %c0_29 = arith.constant 0 : index
      %48 = vector.load %arg10[%c0_28, %c0_29] : memref<256x32xbf16, #tpu.memory_space<vmem>>, vector<256x32xbf16>
      %cst_30 = arith.constant dense<0.000000e+00> : vector<128x32xf32>
      %49 = tpu.matmul %47, %48, %cst_30 {dimension_numbers = #tpu.dot_dimension_numbers<[1], [0], [0], [1], [0, 0, 1, 1], [], []>} : vector<128x256xbf16>, vector<256x32xbf16>, vector<128x32xf32> -> vector<128x32xf32>
      %50 = vector.broadcast %46 : vector<128x1xf32> to vector<128x32xf32>
      %51 = arith.mulf %49, %50 : vector<128x32xf32>
      %52 = arith.truncf %51 : vector<128x32xf32> to vector<128x32xbf16>
      %cst_31 = arith.constant dense<0.000000e+00> : vector<128x32xf32>
      %53 = tpu.matmul %52, %30, %cst_31 {dimension_numbers = #tpu.dot_dimension_numbers<[1], [0], [0], [1], [0, 0, 1, 1], [], []>} : vector<128x32xbf16>, vector<32x32xbf16>, vector<128x32xf32> -> vector<128x32xf32>
      %54 = vector.broadcast %31 : vector<1x32xf32> to vector<128x32xf32>
      %55 = arith.addf %53, %54 : vector<128x32xf32>
      %c0_32 = arith.constant 0 : index
      %56 = arith.index_cast %34 : i32 to index
      %c0_33 = arith.constant 0 : index
      %57 = vector.load %arg1[%c0_32, %56, %c0_33] : memref<1x256x32xf32, #tpu.memory_space<vmem>>, vector<1x128x32xf32>
      %58 = vector.shape_cast %57 : vector<1x128x32xf32> to vector<128x32xf32>
      %59 = arith.addf %55, %58 : vector<128x32xf32>
      %c0_34 = arith.constant 0 : index
      %60 = arith.index_cast %34 : i32 to index
      %c0_35 = arith.constant 0 : index
      %61 = vector.load %arg7[%c0_34, %60, %c0_35] : memref<1x256x32xf32, #tpu.memory_space<vmem>>, vector<1x128x32xf32>
      %62 = vector.shape_cast %61 : vector<1x128x32xf32> to vector<128x32xf32>
      %63 = vector.shape_cast %59 : vector<128x32xf32> to vector<1x128x32xf32>
      tpu.vector_store %arg7[%c0_34, %60, %c0_35], %63 {strides = array<i32>} : memref<1x256x32xf32, #tpu.memory_space<vmem>>, vector<1x128x32xf32>,
    }
    %c2_i32_21 = arith.constant 2 : i32
    return
  }
  func.func @transform_0(%arg0: i32) -> (i32, i32, i32) {
    %c0_i32 = arith.constant 0 : i32
    %c0_i32_0 = arith.constant 0 : i32
    %c0_i32_1 = arith.constant 0 : i32
    return %arg0, %c0_i32, %c0_i32_0 : i32, i32, i32
  }
  func.func @transform_1(%arg0: i32) -> (i32, i32) {
    %c0_i32 = arith.constant 0 : i32
    %c0_i32_0 = arith.constant 0 : i32
    %c0_i32_1 = arith.constant 0 : i32
    return %c0_i32, %c0_i32_0 : i32, i32
  }
  func.func @transform_2(%arg0: i32) -> (i32, i32) {
    %c0_i32 = arith.constant 0 : i32
    %c0_i32_0 = arith.constant 0 : i32
    %c0_i32_1 = arith.constant 0 : i32
    return %c0_i32, %c0_i32_0 : i32, i32
  }
  func.func @transform_3(%arg0: i32) -> (i32, i32) {
    %c0_i32 = arith.constant 0 : i32
    %c0_i32_0 = arith.constant 0 : i32
    %c0_i32_1 = arith.constant 0 : i32
    return %c0_i32, %c0_i32_0 : i32, i32
  }
  func.func @transform_4(%arg0: i32) -> (i32, i32) {
    %c0_i32 = arith.constant 0 : i32
    %c0_i32_0 = arith.constant 0 : i32
    %c0_i32_1 = arith.constant 0 : i32
    return %c0_i32, %c0_i32_0 : i32, i32
  }
  func.func @transform_5(%arg0: i32) -> (i32, i32) {
    %c0_i32 = arith.constant 0 : i32
    %c0_i32_0 = arith.constant 0 : i32
    %c0_i32_1 = arith.constant 0 : i32
    return %c0_i32, %c0_i32_0 : i32, i32
  }
  func.func @transform_6(%arg0: i32) -> (i32, i32, i32) {
    %c0_i32 = arith.constant 0 : i32
    %c0_i32_0 = arith.constant 0 : i32
    %c0_i32_1 = arith.constant 0 : i32
    return %arg0, %c0_i32, %c0_i32_0 : i32, i32, i32
  }
}

</mosaic_0001>

<llo_original>
// kernel: tpu_custom_call.1
$region0: #{tpu_custom_call.1}
  #allocation0 [shape = 'u32[]', space=smem, size = 0x4, offset = 0x4, fixed_abs, tag = 'smem constant byte address 0x4 - core index']
  #allocation1 [shape = 'u32[144,128]{1,0:T(1,128)}', space=vmem, size = 0x12000, scoped, tag = 'internal scratch']
  #allocation2 [shape = 'bf16[256,32]{1,0:T(16,128)(2,1)}', space=vmem, size = 0x10000, scoped, tag = 'scratch operand']
  #allocation3 [shape = 'bf16[256,32]{1,0:T(16,128)(2,1)}', space=vmem, size = 0x10000, scoped, tag = 'scratch operand']
  #allocation4 [shape = 'bf16[256,32]{1,0:T(16,128)(2,1)}', space=vmem, size = 0x10000, scoped, tag = 'scratch operand']
  %s0 = inlined_call_operand.vmem [shape: f32[6,256,32], index: 0, kind: input, shape index: {}]
  %s1 = inlined_call_operand.vmem [shape: f32[1,32], index: 1, kind: input, shape index: {}]
  %s2 = inlined_call_operand.vmem [shape: bf16[32,96], index: 2, kind: input, shape index: {}]
  %s3 = inlined_call_operand.vmem [shape: bf16[32,32], index: 3, kind: input, shape index: {}]
  %s4 = inlined_call_operand.vmem [shape: f32[1,96], index: 4, kind: input, shape index: {}]
  %s5 = inlined_call_operand.vmem [shape: f32[1,32], index: 5, kind: input, shape index: {}]
  %s6 = inlined_call_operand.vmem [shape: f32[6,256,32], index: 6, kind: output, shape index: {}]
  %s7 = sld [smem:[#allocation0]]
  $region64: #{tpu_custom_call.1} parent=0
    _
  %s9 = ssub.s32 1, %s7
  %s10 = scalar_select 0, %s9, %s7
  loop: start=0, step=1, limit=8
  $region2: #{tpu_custom_call.1} parent=0 // loop_pre_header
    _
  $region3: #{tpu_custom_call.1} parent=0 // loop_header
    %s12 = sphi 0, %s16
    %p13 = scmp.ge.s32.totalorder %s12, 8
    %s22 = sphi 0, %s24
    %s25 = sphi 0, %s22
    %s26 = sphi 0, %s25
    %s42 = sphi 0, %s26
    %s46 = sphi 0, %s46
    %s48 = sphi 0, %s46
    %s49 = sphi 0, %s48
    %s63 = sphi 0, %s49
    %s67 = sphi 0, %s67
    %s69 = sphi 0, %s67
    %s70 = sphi 0, %s69
    %s84 = sphi 0, %s70
    %s88 = sphi 0, %s88
    %s90 = sphi 0, %s88
    %s91 = sphi 0, %s90
    %s105 = sphi 0, %s91
    %s109 = sphi 0, %s109
    %s111 = sphi 0, %s109
    %s112 = sphi 0, %s111
    %s126 = sphi 0, %s112
    %s130 = sphi 0, %s130
    %s132 = sphi 0, %s130
    %s133 = sphi 0, %s132
    %s147 = sphi 0, %s133
    %s153 = sphi 0, %s155
    %s156 = sphi 0, %s153
    %s157 = sphi 0, %s156
    %s173 = sphi 0, %s157
  $region4: #{tpu_custom_call.1} parent=0 // loop_header_branch
    %15 = sbr.rel (%p13) target = $region8
  $region5: #{tpu_custom_call.1} parent=0 // loop_body
    %s17 = ssub.s32 %s12, 1
    %s18 = ssub.s32 %s12, 2
    %s19 = sadd.s32 %s12, 1
    %s20 = ssub.s32 %s12, %s19
    %p21 = scmp.eq.s32.totalorder %s20, 0
    %s23 = sadd.s32 %s22, 1
    %s24 = scalar_select %p21, %s22, %s23
    %p27 = pneg %p21
    %p28 = scmp.eq.s32.totalorder %s12, 5
    %p29 = por %p27, %p28
    %p30 = scmp.ne.s32.totalorder %s22, %s25
    %p31 = scmp.eq.s32.totalorder %s12, 0
    %p32 = por %p30, %p31
    %p33 = scmp.ne.s32.totalorder %s22, %s25
    %p34 = scmp.eq.s32.totalorder %s17, 5
    %p35 = por %p33, %p34
    %p36 = scmp.ne.s32.totalorder %s25, %s26
    %p37 = scmp.eq.s32.totalorder %s17, 0
    %p38 = por %p36, %p37
    %p39 = scmp.ne.s32.totalorder %s25, %s26
    %p40 = scmp.eq.s32.totalorder %s18, 5
    %p41 = por %p39, %p40
    %p43 = scmp.ne.s32.totalorder %s26, %s42
    %p44 = scmp.eq.s32.totalorder %s18, 0
    %p45 = por %p43, %p44
    %s47 = sadd.s32 %s46, 1
    %p50 = scmp.eq.s32.totalorder %s12, 5
    %p51 = scmp.ne.s32.totalorder %s46, %s48
    %p52 = scmp.eq.s32.totalorder %s12, 0
    %p53 = por %p51, %p52
    %p54 = scmp.ne.s32.totalorder %s46, %s48
    %p55 = scmp.eq.s32.totalorder %s17, 5
    %p56 = por %p54, %p55
    %p57 = scmp.ne.s32.totalorder %s48, %s49
    %p58 = scmp.eq.s32.totalorder %s17, 0
    %p59 = por %p57, %p58
    %p60 = scmp.ne.s32.totalorder %s48, %s49
    %p61 = scmp.eq.s32.totalorder %s18, 5
    %p62 = por %p60, %p61
    %p64 = scmp.ne.s32.totalorder %s49, %s63
    %p65 = scmp.eq.s32.totalorder %s18, 0
    %p66 = por %p64, %p65
    %s68 = sadd.s32 %s67, 1
    %p71 = scmp.eq.s32.totalorder %s12, 5
    %p72 = scmp.ne.s32.totalorder %s67, %s69
    %p73 = scmp.eq.s32.totalorder %s12, 0
    %p74 = por %p72, %p73
    %p75 = scmp.ne.s32.totalorder %s67, %s69
    %p76 = scmp.eq.s32.totalorder %s17, 5
    %p77 = por %p75, %p76
    %p78 = scmp.ne.s32.totalorder %s69, %s70
    %p79 = scmp.eq.s32.totalorder %s17, 0
    %p80 = por %p78, %p79
    %p81 = scmp.ne.s32.totalorder %s69, %s70
    %p82 = scmp.eq.s32.totalorder %s18, 5
    %p83 = por %p81, %p82
    %p85 = scmp.ne.s32.totalorder %s70, %s84
    %p86 = scmp.eq.s32.totalorder %s18, 0
    %p87 = por %p85, %p86
    %s89 = sadd.s32 %s88, 1
    %p92 = scmp.eq.s32.totalorder %s12, 5
    %p93 = scmp.ne.s32.totalorder %s88, %s90
    %p94 = scmp.eq.s32.totalorder %s12, 0
    %p95 = por %p93, %p94
    %p96 = scmp.ne.s32.totalorder %s88, %s90
    %p97 = scmp.eq.s32.totalorder %s17, 5
    %p98 = por %p96, %p97
    %p99 = scmp.ne.s32.totalorder %s90, %s91
    %p100 = scmp.eq.s32.totalorder %s17, 0
    %p101 = por %p99, %p100
    %p102 = scmp.ne.s32.totalorder %s90, %s91
    %p103 = scmp.eq.s32.totalorder %s18, 5
    %p104 = por %p102, %p103
    %p106 = scmp.ne.s32.totalorder %s91, %s105
    %p107 = scmp.eq.s32.totalorder %s18, 0
    %p108 = por %p106, %p107
    %s110 = sadd.s32 %s109, 1
    %p113 = scmp.eq.s32.totalorder %s12, 5
    %p114 = scmp.ne.s32.totalorder %s109, %s111
    %p115 = scmp.eq.s32.totalorder %s12, 0
    %p116 = por %p114, %p115
    %p117 = scmp.ne.s32.totalorder %s109, %s111
    %p118 = scmp.eq.s32.totalorder %s17, 5
    %p119 = por %p117, %p118
    %p120 = scmp.ne.s32.totalorder %s111, %s112
    %p121 = scmp.eq.s32.totalorder %s17, 0
    %p122 = por %p120, %p121
    %p123 = scmp.ne.s32.totalorder %s111, %s112
    %p124 = scmp.eq.s32.totalorder %s18, 5
    %p125 = por %p123, %p124
    %p127 = scmp.ne.s32.totalorder %s112, %s126
    %p128 = scmp.eq.s32.totalorder %s18, 0
    %p129 = por %p127, %p128
    %s131 = sadd.s32 %s130, 1
    %p134 = scmp.eq.s32.totalorder %s12, 5
    %p135 = scmp.ne.s32.totalorder %s130, %s132
    %p136 = scmp.eq.s32.totalorder %s12, 0
    %p137 = por %p135, %p136
    %p138 = scmp.ne.s32.totalorder %s130, %s132
    %p139 = scmp.eq.s32.totalorder %s17, 5
    %p140 = por %p138, %p139
    %p141 = scmp.ne.s32.totalorder %s132, %s133
    %p142 = scmp.eq.s32.totalorder %s17, 0
    %p143 = por %p141, %p142
    %p144 = scmp.ne.s32.totalorder %s132, %s133
    %p145 = scmp.eq.s32.totalorder %s18, 5
    %p146 = por %p144, %p145
    %p148 = scmp.ne.s32.totalorder %s133, %s147
    %p149 = scmp.eq.s32.totalorder %s18, 0
    %p150 = por %p148, %p149
    %s151 = ssub.s32 %s12, %s19
    %p152 = scmp.eq.s32.totalorder %s151, 0
    %s154 = sadd.s32 %s153, 1
    %s155 = scalar_select %p152, %s153, %s154
    %p158 = pneg %p152
    %p159 = scmp.eq.s32.totalorder %s12, 5
    %p160 = por %p158, %p159
    %p161 = scmp.ne.s32.totalorder %s153, %s156
    %p162 = scmp.eq.s32.totalorder %s12, 0
    %p163 = por %p161, %p162
    %p164 = scmp.ne.s32.totalorder %s153, %s156
    %p165 = scmp.eq.s32.totalorder %s17, 5
    %p166 = por %p164, %p165
    %p167 = scmp.ne.s32.totalorder %s156, %s157
    %p168 = scmp.eq.s32.totalorder %s17, 0
    %p169 = por %p167, %p168
    %p170 = scmp.ne.s32.totalorder %s156, %s157
    %p171 = scmp.eq.s32.totalorder %s18, 5
    %p172 = por %p170, %p171
    %p174 = scmp.ne.s32.totalorder %s157, %s173
    %p175 = scmp.eq.s32.totalorder %s18, 0
    %p176 = por %p174, %p175
    %p177 = scmp.le.s32.totalorder 1, %s12
    %p178 = scmp.lt.s32.totalorder %s12, 7
    %p179 = pnand %p177, %p178
    %p180 = pneg %p179
    // Predicated region
    $region9: #{tpu_custom_call.1} parent=5 // pred_check
      _
    $region10: #{tpu_custom_call.1} parent=5 // pred_check_branch
      %182 = sbr.rel (%p179) target = $region12
    $region11: #{tpu_custom_call.1} parent=5 // pred_region
      %s183 = ssub.s32 %s12, 1
      // Predicated region
      $region13: #{tpu_custom_call.1} parent=11 // pred_check
        %p184 = pneg %p59
      $region14: #{tpu_custom_call.1} parent=11 // pred_check_branch
        %186 = sbr.rel (%p184) target = $region16
      $region15: #{tpu_custom_call.1} parent=11 // pred_region
        _
      $region16: #{tpu_custom_call.1} parent=11 // pred_fallthru
        _
      // Predicated region
      $region17: #{tpu_custom_call.1} parent=11 // pred_check
        %p187 = pneg %p80
      $region18: #{tpu_custom_call.1} parent=11 // pred_check_branch
        %189 = sbr.rel (%p187) target = $region20
      $region19: #{tpu_custom_call.1} parent=11 // pred_region
        _
      $region20: #{tpu_custom_call.1} parent=11 // pred_fallthru
        _
      // Predicated region
      $region21: #{tpu_custom_call.1} parent=11 // pred_check
        %p190 = pneg %p101
      $region22: #{tpu_custom_call.1} parent=11 // pred_check_branch
        %192 = sbr.rel (%p190) target = $region24
      $region23: #{tpu_custom_call.1} parent=11 // pred_region
        _
      $region24: #{tpu_custom_call.1} parent=11 // pred_fallthru
        _
      // Predicated region
      $region25: #{tpu_custom_call.1} parent=11 // pred_check
        %p193 = pneg %p122
      $region26: #{tpu_custom_call.1} parent=11 // pred_check_branch
        %195 = sbr.rel (%p193) target = $region28
      $region27: #{tpu_custom_call.1} parent=11 // pred_region
        _
      $region28: #{tpu_custom_call.1} parent=11 // pred_fallthru
        _
      // Predicated region
      $region29: #{tpu_custom_call.1} parent=11 // pred_check
        %p196 = pneg %p143
      $region30: #{tpu_custom_call.1} parent=11 // pred_check_branch
        %198 = sbr.rel (%p196) target = $region32
      $region31: #{tpu_custom_call.1} parent=11 // pred_region
        _
      $region32: #{tpu_custom_call.1} parent=11 // pred_fallthru
        _
    $region12: #{tpu_custom_call.1} parent=5 // pred_fallthru
      _
    %p199 = scmp.lt.s32.totalorder %s12, 6
    // Predicated region
    $region33: #{tpu_custom_call.1} parent=5 // pred_check
      %p200 = pneg %p199
    $region34: #{tpu_custom_call.1} parent=5 // pred_check_branch
      %202 = sbr.rel (%p200) target = $region36
    $region35: #{tpu_custom_call.1} parent=5 // pred_region
      // Predicated region
      $region37: #{tpu_custom_call.1} parent=35 // pred_check
        %p203 = pneg %p32
      $region38: #{tpu_custom_call.1} parent=35 // pred_check_branch
        %205 = sbr.rel (%p203) target = $region40
      $region39: #{tpu_custom_call.1} parent=35 // pred_region
        %p206 = scmp.lt.s32.totalorder %s12, 5
        %s207 = scalar_select %p206, %s12, 5
        %s208 = smul.addr %s207, 32
        %s209 = smul.addr %s208, 8
        %s210 = scalar_lea.vmem %s0, %s209
      $region40: #{tpu_custom_call.1} parent=35 // pred_fallthru
        _
    $region36: #{tpu_custom_call.1} parent=5 // pred_fallthru
      _
    %p211 = scmp.le.s32.totalorder 1, %s12
    %p212 = scmp.lt.s32.totalorder %s12, 7
    %p213 = pnand %p211, %p212
    %p214 = pneg %p213
    // Predicated region
    $region41: #{tpu_custom_call.1} parent=5 // pred_check
      _
    $region42: #{tpu_custom_call.1} parent=5 // pred_check_branch
      %216 = sbr.rel (%p213) target = $region44
    $region43: #{tpu_custom_call.1} parent=5 // pred_region
      %s217 = ssub.s32 %s12, 1
      %p218 = scmp.lt.s32.totalorder %s17, 5
      %s219 = scalar_select %p218, %s17, 5
      %s220 = smul.addr %s219, 32
      %s221 = smul.addr %s220, 8
      %s222 = scalar_lea.vmem %s0, %s221
      %p223 = pneg %p38
      %p224 = pneg %p35
      %p225 = pneg %p59
      %p226 = pneg %p56
      %p227 = pneg %p80
      %p228 = pneg %p77
      %p229 = pneg %p101
      %p230 = pneg %p98
      %p231 = pneg %p122
      %p232 = pneg %p119
      %p233 = pneg %p143
      %p234 = pneg %p140
      %p235 = pneg %p169
      %p236 = pneg %p166
      %p237 = scmp.lt.s32.totalorder %s17, 5
      %s238 = scalar_select %p237, %s17, 5
      %s239 = smul.addr %s238, 32
      %s240 = smul.addr %s239, 8
      %s241 = scalar_lea.vmem %s6, %s240
      %p242 = scmp.lt.s32.totalorder %s17, 5
      %s243 = scalar_select %p242, %s17, 5
      %s244 = smul.addr %s243, 32
      %s245 = smul.addr %s244, 8
      %s246 = scalar_lea.vmem %s0, %s245
      %p247 = scmp.lt.s32.totalorder %s17, 5
      %s248 = scalar_select %p247, %s17, 5
      %s249 = smul.addr %s248, 32
      %s250 = smul.addr %s249, 8
      %s251 = scalar_lea.vmem %s6, %s250
      %v253 = vld [vmem:[%s246] sm:$0xff]
      %v254 = vld [vmem:[%s246 + $0x8] sm:$0xff]
      %v255 = vld [vmem:[%s246 + $0x10] sm:$0xff]
      %v256 = vld [vmem:[%s246 + $0x18] sm:$0xff]
      %v257 = vld [vmem:[%s246 + $0x20] sm:$0xff]
      %v258 = vld [vmem:[%s246 + $0x28] sm:$0xff]
      %v259 = vld [vmem:[%s246 + $0x30] sm:$0xff]
      %v260 = vld [vmem:[%s246 + $0x38] sm:$0xff]
      %v261 = vld [vmem:[%s246 + $0x40] sm:$0xff]
      %v262 = vld [vmem:[%s246 + $0x48] sm:$0xff]
      %v263 = vld [vmem:[%s246 + $0x50] sm:$0xff]
      %v264 = vld [vmem:[%s246 + $0x58] sm:$0xff]
      %v265 = vld [vmem:[%s246 + $0x60] sm:$0xff]
      %v266 = vld [vmem:[%s246 + $0x68] sm:$0xff]
      %v267 = vld [vmem:[%s246 + $0x70] sm:$0xff]
      %v268 = vld [vmem:[%s246 + $0x78] sm:$0xff]
      %v269 = vld [vmem:[%s246 + $0x80] sm:$0xff]
      %v270 = vld [vmem:[%s246 + $0x88] sm:$0xff]
      %v271 = vld [vmem:[%s246 + $0x90] sm:$0xff]
      %v272 = vld [vmem:[%s246 + $0x98] sm:$0xff]
      %v273 = vld [vmem:[%s246 + $0xa0] sm:$0xff]
      %v274 = vld [vmem:[%s246 + $0xa8] sm:$0xff]
      %v275 = vld [vmem:[%s246 + $0xb0] sm:$0xff]
      %v276 = vld [vmem:[%s246 + $0xb8] sm:$0xff]
      %v277 = vld [vmem:[%s246 + $0xc0] sm:$0xff]
      %v278 = vld [vmem:[%s246 + $0xc8] sm:$0xff]
      %v279 = vld [vmem:[%s246 + $0xd0] sm:$0xff]
      %v280 = vld [vmem:[%s246 + $0xd8] sm:$0xff]
      %v281 = vld [vmem:[%s246 + $0xe0] sm:$0xff]
      %v282 = vld [vmem:[%s246 + $0xe8] sm:$0xff]
      %v283 = vld [vmem:[%s246 + $0xf0] sm:$0xff]
      %v284 = vld [vmem:[%s246 + $0xf8] sm:$0xff]
      %v285 = vmul.f32 %v253, %v253
      %v286 = vmul.f32 %v254, %v254
      %v287 = vmul.f32 %v255, %v255
      %v288 = vmul.f32 %v256, %v256
      %v289 = vmul.f32 %v257, %v257
      %v290 = vmul.f32 %v258, %v258
      %v291 = vmul.f32 %v259, %v259
      %v292 = vmul.f32 %v260, %v260
      %v293 = vmul.f32 %v261, %v261
      %v294 = vmul.f32 %v262, %v262
      %v295 = vmul.f32 %v263, %v263
      %v296 = vmul.f32 %v264, %v264
      %v297 = vmul.f32 %v265, %v265
      %v298 = vmul.f32 %v266, %v266
      %v299 = vmul.f32 %v267, %v267
      %v300 = vmul.f32 %v268, %v268
      %v301 = vmul.f32 %v269, %v269
      %v302 = vmul.f32 %v270, %v270
      %v303 = vmul.f32 %v271, %v271
      %v304 = vmul.f32 %v272, %v272
      %v305 = vmul.f32 %v273, %v273
      %v306 = vmul.f32 %v274, %v274
      %v307 = vmul.f32 %v275, %v275
      %v308 = vmul.f32 %v276, %v276
      %v309 = vmul.f32 %v277, %v277
      %v310 = vmul.f32 %v278, %v278
      %v311 = vmul.f32 %v279, %v279
      %v312 = vmul.f32 %v280, %v280
      %v313 = vmul.f32 %v281, %v281
      %v314 = vmul.f32 %v282, %v282
      %v315 = vmul.f32 %v283, %v283
      %v316 = vmul.f32 %v284, %v284
      %vm317 = vcmask 261120
      %v318 = vsel %vm317, %v285, 0.0
      %319 = vadd.xlane.f32.xlu0 %v318
      %v320 = vpop.xlane.xlu0 %319
      %v321 = vsel %vm317, %v286, 0.0
      %322 = vadd.xlane.f32.xlu0 %v321
      %v323 = vpop.xlane.xlu0 %322
      %v324 = vsel %vm317, %v287, 0.0
      %325 = vadd.xlane.f32.xlu0 %v324
      %v326 = vpop.xlane.xlu0 %325
      %v327 = vsel %vm317, %v288, 0.0
      %328 = vadd.xlane.f32.xlu0 %v327
      %v329 = vpop.xlane.xlu0 %328
      %v330 = vsel %vm317, %v289, 0.0
      %331 = vadd.xlane.f32.xlu0 %v330
      %v332 = vpop.xlane.xlu0 %331
      %v333 = vsel %vm317, %v290, 0.0
      %334 = vadd.xlane.f32.xlu0 %v333
      %v335 = vpop.xlane.xlu0 %334
      %v336 = vsel %vm317, %v291, 0.0
      %337 = vadd.xlane.f32.xlu0 %v336
      %v338 = vpop.xlane.xlu0 %337
      %v339 = vsel %vm317, %v292, 0.0
      %340 = vadd.xlane.f32.xlu0 %v339
      %v341 = vpop.xlane.xlu0 %340
      %v342 = vsel %vm317, %v293, 0.0
      %343 = vadd.xlane.f32.xlu0 %v342
      %v344 = vpop.xlane.xlu0 %343
      %v345 = vsel %vm317, %v294, 0.0
      %346 = vadd.xlane.f32.xlu0 %v345
      %v347 = vpop.xlane.xlu0 %346
      %v348 = vsel %vm317, %v295, 0.0
      %349 = vadd.xlane.f32.xlu0 %v348
      %v350 = vpop.xlane.xlu0 %349
      %v351 = vsel %vm317, %v296, 0.0
      %352 = vadd.xlane.f32.xlu0 %v351
      %v353 = vpop.xlane.xlu0 %352
      %v354 = vsel %vm317, %v297, 0.0
      %355 = vadd.xlane.f32.xlu0 %v354
      %v356 = vpop.xlane.xlu0 %355
      %v357 = vsel %vm317, %v298, 0.0
      %358 = vadd.xlane.f32.xlu0 %v357
      %v359 = vpop.xlane.xlu0 %358
      %v360 = vsel %vm317, %v299, 0.0
      %361 = vadd.xlane.f32.xlu0 %v360
      %v362 = vpop.xlane.xlu0 %361
      %v363 = vsel %vm317, %v300, 0.0
      %364 = vadd.xlane.f32.xlu0 %v363
      %v365 = vpop.xlane.xlu0 %364
      %v366 = vsel %vm317, %v301, 0.0
      %367 = vadd.xlane.f32.xlu0 %v366
      %v368 = vpop.xlane.xlu0 %367
      %v369 = vsel %vm317, %v302, 0.0
      %370 = vadd.xlane.f32.xlu0 %v369
      %v371 = vpop.xlane.xlu0 %370
      %v372 = vsel %vm317, %v303, 0.0
      %373 = vadd.xlane.f32.xlu0 %v372
      %v374 = vpop.xlane.xlu0 %373
      %v375 = vsel %vm317, %v304, 0.0
      %376 = vadd.xlane.f32.xlu0 %v375
      %v377 = vpop.xlane.xlu0 %376
      %v378 = vsel %vm317, %v305, 0.0
      %379 = vadd.xlane.f32.xlu0 %v378
      %v380 = vpop.xlane.xlu0 %379
      %v381 = vsel %vm317, %v306, 0.0
      %382 = vadd.xlane.f32.xlu0 %v381
      %v383 = vpop.xlane.xlu0 %382
      %v384 = vsel %vm317, %v307, 0.0
      %385 = vadd.xlane.f32.xlu0 %v384
      %v386 = vpop.xlane.xlu0 %385
      %v387 = vsel %vm317, %v308, 0.0
      %388 = vadd.xlane.f32.xlu0 %v387
      %v389 = vpop.xlane.xlu0 %388
      %v390 = vsel %vm317, %v309, 0.0
      %391 = vadd.xlane.f32.xlu0 %v390
      %v392 = vpop.xlane.xlu0 %391
      %v393 = vsel %vm317, %v310, 0.0
      %394 = vadd.xlane.f32.xlu0 %v393
      %v395 = vpop.xlane.xlu0 %394
      %v396 = vsel %vm317, %v311, 0.0
      %397 = vadd.xlane.f32.xlu0 %v396
      %v398 = vpop.xlane.xlu0 %397
      %v399 = vsel %vm317, %v312, 0.0
      %400 = vadd.xlane.f32.xlu0 %v399
      %v401 = vpop.xlane.xlu0 %400
      %v402 = vsel %vm317, %v313, 0.0
      %403 = vadd.xlane.f32.xlu0 %v402
      %v404 = vpop.xlane.xlu0 %403
      %v405 = vsel %vm317, %v314, 0.0
      %406 = vadd.xlane.f32.xlu0 %v405
      %v407 = vpop.xlane.xlu0 %406
      %v408 = vsel %vm317, %v315, 0.0
      %409 = vadd.xlane.f32.xlu0 %v408
      %v410 = vpop.xlane.xlu0 %409
      %v411 = vsel %vm317, %v316, 0.0
      %412 = vadd.xlane.f32.xlu0 %v411
      %v413 = vpop.xlane.xlu0 %412
      %v414 = vmax.f32 %v320, 1e-24
      %v415 = vmax.f32 %v323, 1e-24
      %v416 = vmax.f32 %v326, 1e-24
      %v417 = vmax.f32 %v329, 1e-24
      %v418 = vmax.f32 %v332, 1e-24
      %v419 = vmax.f32 %v335, 1e-24
      %v420 = vmax.f32 %v338, 1e-24
      %v421 = vmax.f32 %v341, 1e-24
      %v422 = vmax.f32 %v344, 1e-24
      %v423 = vmax.f32 %v347, 1e-24
      %v424 = vmax.f32 %v350, 1e-24
      %v425 = vmax.f32 %v353, 1e-24
      %v426 = vmax.f32 %v356, 1e-24
      %v427 = vmax.f32 %v359, 1e-24
      %v428 = vmax.f32 %v362, 1e-24
      %v429 = vmax.f32 %v365, 1e-24
      %v430 = vmax.f32 %v368, 1e-24
      %v431 = vmax.f32 %v371, 1e-24
      %v432 = vmax.f32 %v374, 1e-24
      %v433 = vmax.f32 %v377, 1e-24
      %v434 = vmax.f32 %v380, 1e-24
      %v435 = vmax.f32 %v383, 1e-24
      %v436 = vmax.f32 %v386, 1e-24
      %v437 = vmax.f32 %v389, 1e-24
      %v438 = vmax.f32 %v392, 1e-24
      %v439 = vmax.f32 %v395, 1e-24
      %v440 = vmax.f32 %v398, 1e-24
      %v441 = vmax.f32 %v401, 1e-24
      %v442 = vmax.f32 %v404, 1e-24
      %v443 = vmax.f32 %v407, 1e-24
      %v444 = vmax.f32 %v410, 1e-24
      %v445 = vmax.f32 %v413, 1e-24
      %v446 = vrsqrt.pop %v414
      %v447 = vrsqrt.pop %v415
      %v448 = vrsqrt.pop %v416
      %v449 = vrsqrt.pop %v417
      %v450 = vrsqrt.pop %v418
      %v451 = vrsqrt.pop %v419
      %v452 = vrsqrt.pop %v420
      %v453 = vrsqrt.pop %v421
      %v454 = vrsqrt.pop %v422
      %v455 = vrsqrt.pop %v423
      %v456 = vrsqrt.pop %v424
      %v457 = vrsqrt.pop %v425
      %v458 = vrsqrt.pop %v426
      %v459 = vrsqrt.pop %v427
      %v460 = vrsqrt.pop %v428
      %v461 = vrsqrt.pop %v429
      %v462 = vrsqrt.pop %v430
      %v463 = vrsqrt.pop %v431
      %v464 = vrsqrt.pop %v432
      %v465 = vrsqrt.pop %v433
      %v466 = vrsqrt.pop %v434
      %v467 = vrsqrt.pop %v435
      %v468 = vrsqrt.pop %v436
      %v469 = vrsqrt.pop %v437
      %v470 = vrsqrt.pop %v438
      %v471 = vrsqrt.pop %v439
      %v472 = vrsqrt.pop %v440
      %v473 = vrsqrt.pop %v441
      %v474 = vrsqrt.pop %v442
      %v475 = vrsqrt.pop %v443
      %v476 = vrsqrt.pop %v444
      %v477 = vrsqrt.pop %v445
      %v478 = vmul.f32 %v446, 5.656854
      %v479 = vmul.f32 %v447, 5.656854
      %v480 = vmul.f32 %v448, 5.656854
      %v481 = vmul.f32 %v449, 5.656854
      %v482 = vmul.f32 %v450, 5.656854
      %v483 = vmul.f32 %v451, 5.656854
      %v484 = vmul.f32 %v452, 5.656854
      %v485 = vmul.f32 %v453, 5.656854
      %v486 = vmul.f32 %v454, 5.656854
      %v487 = vmul.f32 %v455, 5.656854
      %v488 = vmul.f32 %v456, 5.656854
      %v489 = vmul.f32 %v457, 5.656854
      %v490 = vmul.f32 %v458, 5.656854
      %v491 = vmul.f32 %v459, 5.656854
      %v492 = vmul.f32 %v460, 5.656854
      %v493 = vmul.f32 %v461, 5.656854
      %v494 = vmul.f32 %v462, 5.656854
      %v495 = vmul.f32 %v463, 5.656854
      %v496 = vmul.f32 %v464, 5.656854
      %v497 = vmul.f32 %v465, 5.656854
      %v498 = vmul.f32 %v466, 5.656854
      %v499 = vmul.f32 %v467, 5.656854
      %v500 = vmul.f32 %v468, 5.656854
      %v501 = vmul.f32 %v469, 5.656854
      %v502 = vmul.f32 %v470, 5.656854
      %v503 = vmul.f32 %v471, 5.656854
      %v504 = vmul.f32 %v472, 5.656854
      %v505 = vmul.f32 %v473, 5.656854
      %v506 = vmul.f32 %v474, 5.656854
      %v507 = vmul.f32 %v475, 5.656854
      %v508 = vmul.f32 %v476, 5.656854
      %v509 = vmul.f32 %v477, 5.656854
      %v510 = vmul.f32 %v253, %v478
      %v511 = vmul.f32 %v254, %v479
      %v512 = vmul.f32 %v255, %v480
      %v513 = vmul.f32 %v256, %v481
      %v514 = vmul.f32 %v257, %v482
      %v515 = vmul.f32 %v258, %v483
      %v516 = vmul.f32 %v259, %v484
      %v517 = vmul.f32 %v260, %v485
      %v518 = vmul.f32 %v261, %v486
      %v519 = vmul.f32 %v262, %v487
      %v520 = vmul.f32 %v263, %v488
      %v521 = vmul.f32 %v264, %v489
      %v522 = vmul.f32 %v265, %v490
      %v523 = vmul.f32 %v266, %v491
      %v524 = vmul.f32 %v267, %v492
      %v525 = vmul.f32 %v268, %v493
      %v526 = vmul.f32 %v269, %v494
      %v527 = vmul.f32 %v270, %v495
      %v528 = vmul.f32 %v271, %v496
      %v529 = vmul.f32 %v272, %v497
      %v530 = vmul.f32 %v273, %v498
      %v531 = vmul.f32 %v274, %v499
      %v532 = vmul.f32 %v275, %v500
      %v533 = vmul.f32 %v276, %v501
      %v534 = vmul.f32 %v277, %v502
      %v535 = vmul.f32 %v278, %v503
      %v536 = vmul.f32 %v279, %v504
      %v537 = vmul.f32 %v280, %v505
      %v538 = vmul.f32 %v281, %v506
      %v539 = vmul.f32 %v282, %v507
      %v540 = vmul.f32 %v283, %v508
      %v541 = vmul.f32 %v284, %v509
      %v542 = vld [vmem:[%s1] sm:$0x1]
      %v544 = vlaneseq
      %v545 = vshrl.u32 %v544, 7
      %v546 = vsub.s32 0, %v545
      %v547 = vrot.slane %v542, %v546
      %v549 = vmul.f32 %v510, %v547
      %v550 = vmul.f32 %v511, %v547
      %v551 = vmul.f32 %v512, %v547
      %v552 = vmul.f32 %v513, %v547
      %v553 = vmul.f32 %v514, %v547
      %v554 = vmul.f32 %v515, %v547
      %v555 = vmul.f32 %v516, %v547
      %v556 = vmul.f32 %v517, %v547
      %v557 = vmul.f32 %v518, %v547
      %v558 = vmul.f32 %v519, %v547
      %v559 = vmul.f32 %v520, %v547
      %v560 = vmul.f32 %v521, %v547
      %v561 = vmul.f32 %v522, %v547
      %v562 = vmul.f32 %v523, %v547
      %v563 = vmul.f32 %v524, %v547
      %v564 = vmul.f32 %v525, %v547
      %v565 = vmul.f32 %v526, %v547
      %v566 = vmul.f32 %v527, %v547
      %v567 = vmul.f32 %v528, %v547
      %v568 = vmul.f32 %v529, %v547
      %v569 = vmul.f32 %v530, %v547
      %v570 = vmul.f32 %v531, %v547
      %v571 = vmul.f32 %v532, %v547
      %v572 = vmul.f32 %v533, %v547
      %v573 = vmul.f32 %v534, %v547
      %v574 = vmul.f32 %v535, %v547
      %v575 = vmul.f32 %v536, %v547
      %v576 = vmul.f32 %v537, %v547
      %v577 = vmul.f32 %v538, %v547
      %v578 = vmul.f32 %v539, %v547
      %v579 = vmul.f32 %v540, %v547
      %v580 = vmul.f32 %v541, %v547
      %v581 = vpack.c.bf16 %v550, %v549
      %v582 = vpack.c.bf16 %v552, %v551
      %v583 = vpack.c.bf16 %v554, %v553
      %v584 = vpack.c.bf16 %v556, %v555
      %v585 = vpack.c.bf16 %v558, %v557
      %v586 = vpack.c.bf16 %v560, %v559
      %v587 = vpack.c.bf16 %v562, %v561
      %v588 = vpack.c.bf16 %v564, %v563
      %v589 = vpack.c.bf16 %v566, %v565
      %v590 = vpack.c.bf16 %v568, %v567
      %v591 = vpack.c.bf16 %v570, %v569
      %v592 = vpack.c.bf16 %v572, %v571
      %v593 = vpack.c.bf16 %v574, %v573
      %v594 = vpack.c.bf16 %v576, %v575
      %v595 = vpack.c.bf16 %v578, %v577
      %v596 = vpack.c.bf16 %v580, %v579
      %v597 = vld [vmem:[%s2] sm:$0xf]
      %v598 = vld [vmem:[%s2 + $0x4] sm:$0xf]
      %v599 = vld [vmem:[%s2 + $0x8] sm:$0xf]
      %v600 = vld [vmem:[%s2 + $0xc] sm:$0xf]
      %v601 = vld [vmem:[%s4] sm:$0x1]
      %v603 = vlaneseq
      %v604 = vshrl.u32 %v603, 7
      %v605 = vsub.s32 0, %v604
      %v606 = vrot.slane %v601, %v605
      %v612 = vunpack.c.l.b16 %v597
      %v613 = vunpack.c.l.b16 %v598
      %v614 = vunpack.c.l.b16 %v599
      %v615 = vunpack.c.l.b16 %v600
      %v616 = vpack.c.b16 %v613, %v612
      %v617 = vpack.c.b16 %v615, %v614
      %v621 = vsel %vm317, %v581, 0
      %v624 = vsel %vm317, %v582, 0
      %v627 = vsel %vm317, %v583, 0
      %v630 = vsel %vm317, %v584, 0
      %v633 = vsel %vm317, %v585, 0
      %v636 = vsel %vm317, %v586, 0
      %v639 = vsel %vm317, %v587, 0
      %v642 = vsel %vm317, %v588, 0
      %v645 = vsel %vm317, %v589, 0
      %v648 = vsel %vm317, %v590, 0
      %v651 = vsel %vm317, %v591, 0
      %v654 = vsel %vm317, %v592, 0
      %v657 = vsel %vm317, %v593, 0
      %v660 = vsel %vm317, %v594, 0
      %v663 = vsel %vm317, %v595, 0
      %v666 = vsel %vm317, %v596, 0
      %668 = vmatprep.subr.bf16.mxu0 0
      %669 = vmatpush1.bf16.msra.mxu0 %v616
      %670 = vmatprep.subr.bf16.mxu0 0
      %671 = vmatpush1.bf16.msra.mxu0 %v617
      %672 = vmatprep.subr.bf16.mxu0 0
      %673 = vmatpush1.bf16.msra.mxu0 0
      %674 = vmatprep.subr.bf16.mxu0 0
      %675 = vmatpush1.bf16.msra.mxu0 0
      %676 = vmatprep.subr.bf16.mxu0 0
      %677 = vmatpush1.bf16.msra.mxu0 0
      %678 = vmatprep.subr.bf16.mxu0 0
      %679 = vmatpush1.bf16.msra.mxu0 0
      %680 = vmatprep.subr.bf16.mxu0 0
      %681 = vmatpush1.bf16.msra.mxu0 0
      %682 = vmatprep.subr.bf16.mxu0 0
      %683 = vmatpush1.bf16.msra.mxu0 0
      %684 = vmatprep.subr.bf16.mxu0 0
      %685 = vmatpush1.bf16.msra.mxu0 0
      %686 = vmatprep.subr.bf16.mxu0 0
      %687 = vmatpush1.bf16.msra.mxu0 0
      %688 = vmatprep.subr.bf16.mxu0 0
      %689 = vmatpush1.bf16.msra.mxu0 0
      %690 = vmatprep.subr.bf16.mxu0 0
      %691 = vmatpush1.bf16.msra.mxu0 0
      %692 = vmatprep.subr.bf16.mxu0 0
      %693 = vmatpush1.bf16.msra.mxu0 0
      %694 = vmatprep.subr.bf16.mxu0 0
      %695 = vmatpush1.bf16.msra.mxu0 0
      %696 = vmatprep.subr.bf16.mxu0 0
      %697 = vmatpush1.bf16.msra.mxu0 0
      %698 = vmatprep.subr.bf16.mxu0 0
      %699 = vmatpush1.bf16.msra.mxu0 0
      %700 = vmatprep.mubr.bf16.mxu0 0
      %701 = vmatmul.mubr.bf16.gmra.mrb[0].mxu0 %v621
      %v702 = vpop.f32.mrb[0].mxu0
      %v703 = vadd.f32 %v606, %v702
      %v704 = vpop.f32.mrb[0].mxu0
      %v705 = vpop.f32.mrb[0].mxu0
      %v706 = vadd.f32 %v606, %v705
      %v707 = vpop.f32.mrb[0].mxu0
      %708 = vmatprep.mubr.bf16.mxu0 0
      %709 = vmatmul.mubr.bf16.gmra.mrb[0].mxu0 %v624
      %v710 = vpop.f32.mrb[0].mxu0
      %v711 = vadd.f32 %v606, %v710
      %v712 = vpop.f32.mrb[0].mxu0
      %v713 = vpop.f32.mrb[0].mxu0
      %v714 = vadd.f32 %v606, %v713
      %v715 = vpop.f32.mrb[0].mxu0
      %716 = vmatprep.mubr.bf16.mxu0 0
      %717 = vmatmul.mubr.bf16.gmra.mrb[0].mxu0 %v627
      %v718 = vpop.f32.mrb[0].mxu0
      %v719 = vadd.f32 %v606, %v718
      %v720 = vpop.f32.mrb[0].mxu0
      %v721 = vpop.f32.mrb[0].mxu0
      %v722 = vadd.f32 %v606, %v721
      %v723 = vpop.f32.mrb[0].mxu0
      %724 = vmatprep.mubr.bf16.mxu0 0
      %725 = vmatmul.mubr.bf16.gmra.mrb[0].mxu0 %v630
      %v726 = vpop.f32.mrb[0].mxu0
      %v727 = vadd.f32 %v606, %v726
      %v728 = vpop.f32.mrb[0].mxu0
      %v729 = vpop.f32.mrb[0].mxu0
      %v730 = vadd.f32 %v606, %v729
      %v731 = vpop.f32.mrb[0].mxu0
      %732 = vmatprep.mubr.bf16.mxu0 0
      %733 = vmatmul.mubr.bf16.gmra.mrb[0].mxu0 %v633
      %v734 = vpop.f32.mrb[0].mxu0
      %v735 = vadd.f32 %v606, %v734
      %v736 = vpop.f32.mrb[0].mxu0
      %v737 = vpop.f32.mrb[0].mxu0
      %v738 = vadd.f32 %v606, %v737
      %v739 = vpop.f32.mrb[0].mxu0
      %740 = vmatprep.mubr.bf16.mxu0 0
      %741 = vmatmul.mubr.bf16.gmra.mrb[0].mxu0 %v636
      %v742 = vpop.f32.mrb[0].mxu0
      %v743 = vadd.f32 %v606, %v742
      %v744 = vpop.f32.mrb[0].mxu0
      %v745 = vpop.f32.mrb[0].mxu0
      %v746 = vadd.f32 %v606, %v745
      %v747 = vpop.f32.mrb[0].mxu0
      %748 = vmatprep.mubr.bf16.mxu0 0
      %749 = vmatmul.mubr.bf16.gmra.mrb[0].mxu0 %v639
      %v750 = vpop.f32.mrb[0].mxu0
      %v751 = vadd.f32 %v606, %v750
      %v752 = vpop.f32.mrb[0].mxu0
      %v753 = vpop.f32.mrb[0].mxu0
      %v754 = vadd.f32 %v606, %v753
      %v755 = vpop.f32.mrb[0].mxu0
      %756 = vmatprep.mubr.bf16.mxu0 0
      %757 = vmatmul.mubr.bf16.gmra.mrb[0].mxu0 %v642
      %v758 = vpop.f32.mrb[0].mxu0
      %v759 = vadd.f32 %v606, %v758
      %v760 = vpop.f32.mrb[0].mxu0
      %v761 = vpop.f32.mrb[0].mxu0
      %v762 = vadd.f32 %v606, %v761
      %v763 = vpop.f32.mrb[0].mxu0
      %764 = vmatprep.mubr.bf16.mxu0 0
      %765 = vmatmul.mubr.bf16.gmra.mrb[0].mxu0 %v645
      %v766 = vpop.f32.mrb[0].mxu0
      %v767 = vadd.f32 %v606, %v766
      %v768 = vpop.f32.mrb[0].mxu0
      %v769 = vpop.f32.mrb[0].mxu0
      %v770 = vadd.f32 %v606, %v769
      %v771 = vpop.f32.mrb[0].mxu0
      %772 = vmatprep.mubr.bf16.mxu0 0
      %773 = vmatmul.mubr.bf16.gmra.mrb[0].mxu0 %v648
      %v774 = vpop.f32.mrb[0].mxu0
      %v775 = vadd.f32 %v606, %v774
      %v776 = vpop.f32.mrb[0].mxu0
      %v777 = vpop.f32.mrb[0].mxu0
      %v778 = vadd.f32 %v606, %v777
      %v779 = vpop.f32.mrb[0].mxu0
      %780 = vmatprep.mubr.bf16.mxu0 0
      %781 = vmatmul.mubr.bf16.gmra.mrb[0].mxu0 %v651
      %v782 = vpop.f32.mrb[0].mxu0
      %v783 = vadd.f32 %v606, %v782
      %v784 = vpop.f32.mrb[0].mxu0
      %v785 = vpop.f32.mrb[0].mxu0
      %v786 = vadd.f32 %v606, %v785
      %v787 = vpop.f32.mrb[0].mxu0
      %788 = vmatprep.mubr.bf16.mxu0 0
      %789 = vmatmul.mubr.bf16.gmra.mrb[0].mxu0 %v654
      %v790 = vpop.f32.mrb[0].mxu0
      %v791 = vadd.f32 %v606, %v790
      %v792 = vpop.f32.mrb[0].mxu0
      %v793 = vpop.f32.mrb[0].mxu0
      %v794 = vadd.f32 %v606, %v793
      %v795 = vpop.f32.mrb[0].mxu0
      %796 = vmatprep.mubr.bf16.mxu0 0
      %797 = vmatmul.mubr.bf16.gmra.mrb[0].mxu0 %v657
      %v798 = vpop.f32.mrb[0].mxu0
      %v799 = vadd.f32 %v606, %v798
      %v800 = vpop.f32.mrb[0].mxu0
      %v801 = vpop.f32.mrb[0].mxu0
      %v802 = vadd.f32 %v606, %v801
      %v803 = vpop.f32.mrb[0].mxu0
      %804 = vmatprep.mubr.bf16.mxu0 0
      %805 = vmatmul.mubr.bf16.gmra.mrb[0].mxu0 %v660
      %v806 = vpop.f32.mrb[0].mxu0
      %v807 = vadd.f32 %v606, %v806
      %v808 = vpop.f32.mrb[0].mxu0
      %v809 = vpop.f32.mrb[0].mxu0
      %v810 = vadd.f32 %v606, %v809
      %v811 = vpop.f32.mrb[0].mxu0
      %812 = vmatprep.mubr.bf16.mxu0 0
      %813 = vmatmul.mubr.bf16.gmra.mrb[0].mxu0 %v663
      %v814 = vpop.f32.mrb[0].mxu0
      %v815 = vadd.f32 %v606, %v814
      %v816 = vpop.f32.mrb[0].mxu0
      %v817 = vpop.f32.mrb[0].mxu0
      %v818 = vadd.f32 %v606, %v817
      %v819 = vpop.f32.mrb[0].mxu0
      %820 = vmatprep.mubr.bf16.mxu0 0
      %821 = vmatmul.mubr.bf16.gmra.mrb[0].mxu0 %v666
      %v822 = vpop.f32.mrb[0].mxu0
      %v823 = vadd.f32 %v606, %v822
      %v824 = vpop.f32.mrb[0].mxu0
      %v825 = vpop.f32.mrb[0].mxu0
      %v826 = vadd.f32 %v606, %v825
      %v827 = vpop.f32.mrb[0].mxu0
      %828 = vdwg.mxu0
      %v829 = vpack.c.bf16 %v706, %v703
      %v830 = vpack.c.bf16 %v714, %v711
      %v831 = vpack.c.bf16 %v722, %v719
      %v832 = vpack.c.bf16 %v730, %v727
      %v833 = vpack.c.bf16 %v738, %v735
      %v834 = vpack.c.bf16 %v746, %v743
      %v835 = vpack.c.bf16 %v754, %v751
      %v836 = vpack.c.bf16 %v762, %v759
      %v837 = vpack.c.bf16 %v770, %v767
      %v838 = vpack.c.bf16 %v778, %v775
      %v839 = vpack.c.bf16 %v786, %v783
      %v840 = vpack.c.bf16 %v794, %v791
      %v841 = vpack.c.bf16 %v802, %v799
      %v842 = vpack.c.bf16 %v810, %v807
      %v843 = vpack.c.bf16 %v818, %v815
      %v844 = vpack.c.bf16 %v826, %v823
      %845 = vst.msk [vmem:[#allocation2] sm:$0xff] %vm317, %v829
      %846 = vst.msk [vmem:[#allocation2 + $0x8] sm:$0xff] %vm317, %v830
      %847 = vst.msk [vmem:[#allocation2 + $0x10] sm:$0xff] %vm317, %v831
      %848 = vst.msk [vmem:[#allocation2 + $0x18] sm:$0xff] %vm317, %v832
      %849 = vst.msk [vmem:[#allocation2 + $0x20] sm:$0xff] %vm317, %v833
      %850 = vst.msk [vmem:[#allocation2 + $0x28] sm:$0xff] %vm317, %v834
      %851 = vst.msk [vmem:[#allocation2 + $0x30] sm:$0xff] %vm317, %v835
      %852 = vst.msk [vmem:[#allocation2 + $0x38] sm:$0xff] %vm317, %v836
      %853 = vst.msk [vmem:[#allocation2 + $0x40] sm:$0xff] %vm317, %v837
      %854 = vst.msk [vmem:[#allocation2 + $0x48] sm:$0xff] %vm317, %v838
      %855 = vst.msk [vmem:[#allocation2 + $0x50] sm:$0xff] %vm317, %v839
      %856 = vst.msk [vmem:[#allocation2 + $0x58] sm:$0xff] %vm317, %v840
      %857 = vst.msk [vmem:[#allocation2 + $0x60] sm:$0xff] %vm317, %v841
      %858 = vst.msk [vmem:[#allocation2 + $0x68] sm:$0xff] %vm317, %v842
      %859 = vst.msk [vmem:[#allocation2 + $0x70] sm:$0xff] %vm317, %v843
      %860 = vst.msk [vmem:[#allocation2 + $0x78] sm:$0xff] %vm317, %v844
      %877 = vrot.lane.b32.xlu0 %v829, 96
      %v878 = vpop.permute.xlu0 %877
      %879 = vrot.lane.b32.xlu0 %v830, 96
      %v880 = vpop.permute.xlu0 %879
      %881 = vrot.lane.b32.xlu0 %v831, 96
      %v882 = vpop.permute.xlu0 %881
      %883 = vrot.lane.b32.xlu0 %v832, 96
      %v884 = vpop.permute.xlu0 %883
      %885 = vrot.lane.b32.xlu0 %v833, 96
      %v886 = vpop.permute.xlu0 %885
      %887 = vrot.lane.b32.xlu0 %v834, 96
      %v888 = vpop.permute.xlu0 %887
      %889 = vrot.lane.b32.xlu0 %v835, 96
      %v890 = vpop.permute.xlu0 %889
      %891 = vrot.lane.b32.xlu0 %v836, 96
      %v892 = vpop.permute.xlu0 %891
      %893 = vrot.lane.b32.xlu0 %v837, 96
      %v894 = vpop.permute.xlu0 %893
      %895 = vrot.lane.b32.xlu0 %v838, 96
      %v896 = vpop.permute.xlu0 %895
      %897 = vrot.lane.b32.xlu0 %v839, 96
      %v898 = vpop.permute.xlu0 %897
      %899 = vrot.lane.b32.xlu0 %v840, 96
      %v900 = vpop.permute.xlu0 %899
      %901 = vrot.lane.b32.xlu0 %v841, 96
      %v902 = vpop.permute.xlu0 %901
      %903 = vrot.lane.b32.xlu0 %v842, 96
      %v904 = vpop.permute.xlu0 %903
      %905 = vrot.lane.b32.xlu0 %v843, 96
      %v906 = vpop.permute.xlu0 %905
      %907 = vrot.lane.b32.xlu0 %v844, 96
      %v908 = vpop.permute.xlu0 %907
      %925 = vst.msk [vmem:[#allocation3] sm:$0xff] %vm317, %v878
      %926 = vst.msk [vmem:[#allocation3 + $0x8] sm:$0xff] %vm317, %v880
      %927 = vst.msk [vmem:[#allocation3 + $0x10] sm:$0xff] %vm317, %v882
      %928 = vst.msk [vmem:[#allocation3 + $0x18] sm:$0xff] %vm317, %v884
      %929 = vst.msk [vmem:[#allocation3 + $0x20] sm:$0xff] %vm317, %v886
      %930 = vst.msk [vmem:[#allocation3 + $0x28] sm:$0xff] %vm317, %v888
      %931 = vst.msk [vmem:[#allocation3 + $0x30] sm:$0xff] %vm317, %v890
      %932 = vst.msk [vmem:[#allocation3 + $0x38] sm:$0xff] %vm317, %v892
      %933 = vst.msk [vmem:[#allocation3 + $0x40] sm:$0xff] %vm317, %v894
      %934 = vst.msk [vmem:[#allocation3 + $0x48] sm:$0xff] %vm317, %v896
      %935 = vst.msk [vmem:[#allocation3 + $0x50] sm:$0xff] %vm317, %v898
      %936 = vst.msk [vmem:[#allocation3 + $0x58] sm:$0xff] %vm317, %v900
      %937 = vst.msk [vmem:[#allocation3 + $0x60] sm:$0xff] %vm317, %v902
      %938 = vst.msk [vmem:[#allocation3 + $0x68] sm:$0xff] %vm317, %v904
      %939 = vst.msk [vmem:[#allocation3 + $0x70] sm:$0xff] %vm317, %v906
      %940 = vst.msk [vmem:[#allocation3 + $0x78] sm:$0xff] %vm317, %v908
      %941 = vrot.lane.b32.xlu0 %v829, 64
      %v942 = vpop.permute.xlu0 %941
      %943 = vrot.lane.b32.xlu0 %v830, 64
      %v944 = vpop.permute.xlu0 %943
      %945 = vrot.lane.b32.xlu0 %v831, 64
      %v946 = vpop.permute.xlu0 %945
      %947 = vrot.lane.b32.xlu0 %v832, 64
      %v948 = vpop.permute.xlu0 %947
      %949 = vrot.lane.b32.xlu0 %v833, 64
      %v950 = vpop.permute.xlu0 %949
      %951 = vrot.lane.b32.xlu0 %v834, 64
      %v952 = vpop.permute.xlu0 %951
      %953 = vrot.lane.b32.xlu0 %v835, 64
      %v954 = vpop.permute.xlu0 %953
      %955 = vrot.lane.b32.xlu0 %v836, 64
      %v956 = vpop.permute.xlu0 %955
      %957 = vrot.lane.b32.xlu0 %v837, 64
      %v958 = vpop.permute.xlu0 %957
      %959 = vrot.lane.b32.xlu0 %v838, 64
      %v960 = vpop.permute.xlu0 %959
      %961 = vrot.lane.b32.xlu0 %v839, 64
      %v962 = vpop.permute.xlu0 %961
      %963 = vrot.lane.b32.xlu0 %v840, 64
      %v964 = vpop.permute.xlu0 %963
      %965 = vrot.lane.b32.xlu0 %v841, 64
      %v966 = vpop.permute.xlu0 %965
      %967 = vrot.lane.b32.xlu0 %v842, 64
      %v968 = vpop.permute.xlu0 %967
      %969 = vrot.lane.b32.xlu0 %v843, 64
      %v970 = vpop.permute.xlu0 %969
      %971 = vrot.lane.b32.xlu0 %v844, 64
      %v972 = vpop.permute.xlu0 %971
      %989 = vst.msk [vmem:[#allocation4] sm:$0xff] %vm317, %v942
      %990 = vst.msk [vmem:[#allocation4 + $0x8] sm:$0xff] %vm317, %v944
      %991 = vst.msk [vmem:[#allocation4 + $0x10] sm:$0xff] %vm317, %v946
      %992 = vst.msk [vmem:[#allocation4 + $0x18] sm:$0xff] %vm317, %v948
      %993 = vst.msk [vmem:[#allocation4 + $0x20] sm:$0xff] %vm317, %v950
      %994 = vst.msk [vmem:[#allocation4 + $0x28] sm:$0xff] %vm317, %v952
      %995 = vst.msk [vmem:[#allocation4 + $0x30] sm:$0xff] %vm317, %v954
      %996 = vst.msk [vmem:[#allocation4 + $0x38] sm:$0xff] %vm317, %v956
      %997 = vst.msk [vmem:[#allocation4 + $0x40] sm:$0xff] %vm317, %v958
      %998 = vst.msk [vmem:[#allocation4 + $0x48] sm:$0xff] %vm317, %v960
      %999 = vst.msk [vmem:[#allocation4 + $0x50] sm:$0xff] %vm317, %v962
      %1000 = vst.msk [vmem:[#allocation4 + $0x58] sm:$0xff] %vm317, %v964
      %1001 = vst.msk [vmem:[#allocation4 + $0x60] sm:$0xff] %vm317, %v966
      %1002 = vst.msk [vmem:[#allocation4 + $0x68] sm:$0xff] %vm317, %v968
      %1003 = vst.msk [vmem:[#allocation4 + $0x70] sm:$0xff] %vm317, %v970
      %1004 = vst.msk [vmem:[#allocation4 + $0x78] sm:$0xff] %vm317, %v972
      %v1005 = vld [vmem:[%s3] sm:$0xf]
      %v1006 = vld [vmem:[%s3 + $0x4] sm:$0xf]
      %v1007 = vld [vmem:[%s3 + $0x8] sm:$0xf]
      %v1008 = vld [vmem:[%s3 + $0xc] sm:$0xf]
      %v1009 = vld [vmem:[%s5] sm:$0x1]
      loop: start=0, step=1, limit=2
      $region45: #{tpu_custom_call.1} parent=43 // loop_pre_header
        _
      $region46: #{tpu_custom_call.1} parent=43 // loop_header
        %s1011 = sphi 0, %s1015
        %p1012 = scmp.ge.s32.totalorder %s1011, 2
      $region47: #{tpu_custom_call.1} parent=43 // loop_header_branch
        %1014 = sbr.rel (%p1012) target = $region51
      $region48: #{tpu_custom_call.1} parent=43 // loop_body
        %s1016 = smul.u32 %s1011, 128
        %s1017 = sshra.s32 %s1016, 4
        %s1018 = sand.u32 %s1016, 15
        %s1019 = smul.addr %s1017, 8
        %s1020 = scalar_lea.vmem [#allocation2], %s1019
        %v1021 = vld [vmem:[%s1020] sm:$0xff]
        %v1022 = vld [vmem:[%s1020 + $0x8] sm:$0xff]
        %v1023 = vld [vmem:[%s1020 + $0x10] sm:$0xff]
        %v1024 = vld [vmem:[%s1020 + $0x18] sm:$0xff]
        %v1025 = vld [vmem:[%s1020 + $0x20] sm:$0xff]
        %v1026 = vld [vmem:[%s1020 + $0x28] sm:$0xff]
        %v1027 = vld [vmem:[%s1020 + $0x30] sm:$0xff]
        %v1028 = vld [vmem:[%s1020 + $0x38] sm:$0xff]
        %v1029 = vld [vmem:[#allocation3] sm:$0xff]
        %v1030 = vld [vmem:[#allocation3 + $0x8] sm:$0xff]
        %v1031 = vld [vmem:[#allocation3 + $0x10] sm:$0xff]
        %v1032 = vld [vmem:[#allocation3 + $0x18] sm:$0xff]
        %v1033 = vld [vmem:[#allocation3 + $0x20] sm:$0xff]
        %v1034 = vld [vmem:[#allocation3 + $0x28] sm:$0xff]
        %v1035 = vld [vmem:[#allocation3 + $0x30] sm:$0xff]
        %v1036 = vld [vmem:[#allocation3 + $0x38] sm:$0xff]
        %v1037 = vld [vmem:[#allocation3 + $0x40] sm:$0xff]
        %v1038 = vld [vmem:[#allocation3 + $0x48] sm:$0xff]
        %v1039 = vld [vmem:[#allocation3 + $0x50] sm:$0xff]
        %v1040 = vld [vmem:[#allocation3 + $0x58] sm:$0xff]
        %v1041 = vld [vmem:[#allocation3 + $0x60] sm:$0xff]
        %v1042 = vld [vmem:[#allocation3 + $0x68] sm:$0xff]
        %v1043 = vld [vmem:[#allocation3 + $0x70] sm:$0xff]
        %v1044 = vld [vmem:[#allocation3 + $0x78] sm:$0xff]
        %v1046 = vsel %vm317, %v1021, 0
        %v1049 = vsel %vm317, %v1022, 0
        %v1052 = vsel %vm317, %v1023, 0
        %v1055 = vsel %vm317, %v1024, 0
        %v1058 = vsel %vm317, %v1025, 0
        %v1061 = vsel %vm317, %v1026, 0
        %v1064 = vsel %vm317, %v1027, 0
        %v1067 = vsel %vm317, %v1028, 0
        %v1070 = vsel %vm317, %v1029, 0
        %v1073 = vsel %vm317, %v1030, 0
        %v1076 = vsel %vm317, %v1031, 0
        %v1079 = vsel %vm317, %v1032, 0
        %v1082 = vsel %vm317, %v1033, 0
        %v1085 = vsel %vm317, %v1034, 0
        %v1088 = vsel %vm317, %v1035, 0
        %v1091 = vsel %vm317, %v1036, 0
        %v1094 = vsel %vm317, %v1037, 0
        %v1097 = vsel %vm317, %v1038, 0
        %v1100 = vsel %vm317, %v1039, 0
        %v1103 = vsel %vm317, %v1040, 0
        %v1106 = vsel %vm317, %v1041, 0
        %v1109 = vsel %vm317, %v1042, 0
        %v1112 = vsel %vm317, %v1043, 0
        %v1115 = vsel %vm317, %v1044, 0
        %1117 = vmatprep.subr.bf16.mxu0 0
        %1118 = vmatpush1.bf16.xpose.msra.mxu0 %v1070
        %1119 = vmatprep.subr.bf16.mxu0 0
        %1120 = vmatpush1.bf16.xpose.msra.mxu0 %v1073
        %1121 = vmatprep.subr.bf16.mxu0 0
        %1122 = vmatpush1.bf16.xpose.msra.mxu0 %v1076
        %1123 = vmatprep.subr.bf16.mxu0 0
        %1124 = vmatpush1.bf16.xpose.msra.mxu0 %v1079
        %1125 = vmatprep.subr.bf16.mxu0 0
        %1126 = vmatpush1.bf16.xpose.msra.mxu0 %v1082
        %1127 = vmatprep.subr.bf16.mxu0 0
        %1128 = vmatpush1.bf16.xpose.msra.mxu0 %v1085
        %1129 = vmatprep.subr.bf16.mxu0 0
        %1130 = vmatpush1.bf16.xpose.msra.mxu0 %v1088
        %1131 = vmatprep.subr.bf16.mxu0 0
        %1132 = vmatpush1.bf16.xpose.msra.mxu0 %v1091
        %1133 = vmatprep.subr.bf16.mxu0 0
        %1134 = vmatpush1.bf16.xpose.msra.mxu0 %v1094
        %1135 = vmatprep.subr.bf16.mxu0 0
        %1136 = vmatpush1.bf16.xpose.msra.mxu0 %v1097
        %1137 = vmatprep.subr.bf16.mxu0 0
        %1138 = vmatpush1.bf16.xpose.msra.mxu0 %v1100
        %1139 = vmatprep.subr.bf16.mxu0 0
        %1140 = vmatpush1.bf16.xpose.msra.mxu0 %v1103
        %1141 = vmatprep.subr.bf16.mxu0 0
        %1142 = vmatpush1.bf16.xpose.msra.mxu0 %v1106
        %1143 = vmatprep.subr.bf16.mxu0 0
        %1144 = vmatpush1.bf16.xpose.msra.mxu0 %v1109
        %1145 = vmatprep.subr.bf16.mxu0 0
        %1146 = vmatpush1.bf16.xpose.msra.mxu0 %v1112
        %1147 = vmatprep.subr.bf16.mxu0 0
        %1148 = vmatpush1.bf16.xpose.msra.mxu0 %v1115
        %1149 = vmatprep.mubr.bf16.mxu0 0
        %1150 = vmatmul.mubr.bf16.gmra.mrb[0].mxu0 %v1046
        %v1151 = vpop.f32.mrb[0].mxu0
        %v1152 = vadd.f32 0.0, %v1151
        %v1153 = vpop.f32.mrb[0].mxu0
        %v1154 = vadd.f32 0.0, %v1153
        %v1155 = vpop.f32.mrb[0].mxu0
        %v1156 = vadd.f32 0.0, %v1155
        %v1157 = vpop.f32.mrb[0].mxu0
        %v1158 = vadd.f32 0.0, %v1157
        %1159 = vmatprep.mubr.bf16.mxu0 0
        %1160 = vmatmul.mubr.bf16.gmra.mrb[0].mxu0 %v1049
        %v1161 = vpop.f32.mrb[0].mxu0
        %v1162 = vadd.f32 0.0, %v1161
        %v1163 = vpop.f32.mrb[0].mxu0
        %v1164 = vadd.f32 0.0, %v1163
        %v1165 = vpop.f32.mrb[0].mxu0
        %v1166 = vadd.f32 0.0, %v1165
        %v1167 = vpop.f32.mrb[0].mxu0
        %v1168 = vadd.f32 0.0, %v1167
        %1169 = vmatprep.mubr.bf16.mxu0 0
        %1170 = vmatmul.mubr.bf16.gmra.mrb[0].mxu0 %v1052
        %v1171 = vpop.f32.mrb[0].mxu0
        %v1172 = vadd.f32 0.0, %v1171
        %v1173 = vpop.f32.mrb[0].mxu0
        %v1174 = vadd.f32 0.0, %v1173
        %v1175 = vpop.f32.mrb[0].mxu0
        %v1176 = vadd.f32 0.0, %v1175
        %v1177 = vpop.f32.mrb[0].mxu0
        %v1178 = vadd.f32 0.0, %v1177
        %1179 = vmatprep.mubr.bf16.mxu0 0
        %1180 = vmatmul.mubr.bf16.gmra.mrb[0].mxu0 %v1055
        %v1181 = vpop.f32.mrb[0].mxu0
        %v1182 = vadd.f32 0.0, %v1181
        %v1183 = vpop.f32.mrb[0].mxu0
        %v1184 = vadd.f32 0.0, %v1183
        %v1185 = vpop.f32.mrb[0].mxu0
        %v1186 = vadd.f32 0.0, %v1185
        %v1187 = vpop.f32.mrb[0].mxu0
        %v1188 = vadd.f32 0.0, %v1187
        %1189 = vmatprep.mubr.bf16.mxu0 0
        %1190 = vmatmul.mubr.bf16.gmra.mrb[0].mxu0 %v1058
        %v1191 = vpop.f32.mrb[0].mxu0
        %v1192 = vadd.f32 0.0, %v1191
        %v1193 = vpop.f32.mrb[0].mxu0
        %v1194 = vadd.f32 0.0, %v1193
        %v1195 = vpop.f32.mrb[0].mxu0
        %v1196 = vadd.f32 0.0, %v1195
        %v1197 = vpop.f32.mrb[0].mxu0
        %v1198 = vadd.f32 0.0, %v1197
        %1199 = vmatprep.mubr.bf16.mxu0 0
        %1200 = vmatmul.mubr.bf16.gmra.mrb[0].mxu0 %v1061
        %v1201 = vpop.f32.mrb[0].mxu0
        %v1202 = vadd.f32 0.0, %v1201
        %v1203 = vpop.f32.mrb[0].mxu0
        %v1204 = vadd.f32 0.0, %v1203
        %v1205 = vpop.f32.mrb[0].mxu0
        %v1206 = vadd.f32 0.0, %v1205
        %v1207 = vpop.f32.mrb[0].mxu0
        %v1208 = vadd.f32 0.0, %v1207
        %1209 = vmatprep.mubr.bf16.mxu0 0
        %1210 = vmatmul.mubr.bf16.gmra.mrb[0].mxu0 %v1064
        %v1211 = vpop.f32.mrb[0].mxu0
        %v1212 = vadd.f32 0.0, %v1211
        %v1213 = vpop.f32.mrb[0].mxu0
        %v1214 = vadd.f32 0.0, %v1213
        %v1215 = vpop.f32.mrb[0].mxu0
        %v1216 = vadd.f32 0.0, %v1215
        %v1217 = vpop.f32.mrb[0].mxu0
        %v1218 = vadd.f32 0.0, %v1217
        %1219 = vmatprep.mubr.bf16.mxu0 0
        %1220 = vmatmul.mubr.bf16.gmra.mrb[0].mxu0 %v1067
        %v1221 = vpop.f32.mrb[0].mxu0
        %v1222 = vadd.f32 0.0, %v1221
        %v1223 = vpop.f32.mrb[0].mxu0
        %v1224 = vadd.f32 0.0, %v1223
        %v1225 = vpop.f32.mrb[0].mxu0
        %v1226 = vadd.f32 0.0, %v1225
        %v1227 = vpop.f32.mrb[0].mxu0
        %v1228 = vadd.f32 0.0, %v1227
        %1229 = vdwg.mxu0
        %v1230 = vmax.f32 %v1152, %v1154
        %1231 = vmax.xlane.f32.xlu0 %v1230
        %v1232 = vpop.xlane.xlu0 %1231
        %v1233 = vmax.f32 %v1156, %v1158
        %1234 = vmax.xlane.f32.xlu0 %v1233
        %v1235 = vpop.xlane.xlu0 %1234
        %v1236 = vmax.f32 %v1162, %v1164
        %1237 = vmax.xlane.f32.xlu0 %v1236
        %v1238 = vpop.xlane.xlu0 %1237
        %v1239 = vmax.f32 %v1166, %v1168
        %1240 = vmax.xlane.f32.xlu0 %v1239
        %v1241 = vpop.xlane.xlu0 %1240
        %v1242 = vmax.f32 %v1172, %v1174
        %1243 = vmax.xlane.f32.xlu0 %v1242
        %v1244 = vpop.xlane.xlu0 %1243
        %v1245 = vmax.f32 %v1176, %v1178
        %1246 = vmax.xlane.f32.xlu0 %v1245
        %v1247 = vpop.xlane.xlu0 %1246
        %v1248 = vmax.f32 %v1182, %v1184
        %1249 = vmax.xlane.f32.xlu0 %v1248
        %v1250 = vpop.xlane.xlu0 %1249
        %v1251 = vmax.f32 %v1186, %v1188
        %1252 = vmax.xlane.f32.xlu0 %v1251
        %v1253 = vpop.xlane.xlu0 %1252
        %v1254 = vmax.f32 %v1192, %v1194
        %1255 = vmax.xlane.f32.xlu0 %v1254
        %v1256 = vpop.xlane.xlu0 %1255
        %v1257 = vmax.f32 %v1196, %v1198
        %1258 = vmax.xlane.f32.xlu0 %v1257
        %v1259 = vpop.xlane.xlu0 %1258
        %v1260 = vmax.f32 %v1202, %v1204
        %1261 = vmax.xlane.f32.xlu0 %v1260
        %v1262 = vpop.xlane.xlu0 %1261
        %v1263 = vmax.f32 %v1206, %v1208
        %1264 = vmax.xlane.f32.xlu0 %v1263
        %v1265 = vpop.xlane.xlu0 %1264
        %v1266 = vmax.f32 %v1212, %v1214
        %1267 = vmax.xlane.f32.xlu0 %v1266
        %v1268 = vpop.xlane.xlu0 %1267
        %v1269 = vmax.f32 %v1216, %v1218
        %1270 = vmax.xlane.f32.xlu0 %v1269
        %v1271 = vpop.xlane.xlu0 %1270
        %v1272 = vmax.f32 %v1222, %v1224
        %1273 = vmax.xlane.f32.xlu0 %v1272
        %v1274 = vpop.xlane.xlu0 %1273
        %v1275 = vmax.f32 %v1226, %v1228
        %1276 = vmax.xlane.f32.xlu0 %v1275
        %v1277 = vpop.xlane.xlu0 %1276
        %v1278 = vsub.f32 %v1152, %v1232
        %v1279 = vsub.f32 %v1154, %v1232
        %v1280 = vsub.f32 %v1156, %v1235
        %v1281 = vsub.f32 %v1158, %v1235
        %v1282 = vsub.f32 %v1162, %v1238
        %v1283 = vsub.f32 %v1164, %v1238
        %v1284 = vsub.f32 %v1166, %v1241
        %v1285 = vsub.f32 %v1168, %v1241
        %v1286 = vsub.f32 %v1172, %v1244
        %v1287 = vsub.f32 %v1174, %v1244
        %v1288 = vsub.f32 %v1176, %v1247
        %v1289 = vsub.f32 %v1178, %v1247
        %v1290 = vsub.f32 %v1182, %v1250
        %v1291 = vsub.f32 %v1184, %v1250
        %v1292 = vsub.f32 %v1186, %v1253
        %v1293 = vsub.f32 %v1188, %v1253
        %v1294 = vsub.f32 %v1192, %v1256
        %v1295 = vsub.f32 %v1194, %v1256
        %v1296 = vsub.f32 %v1196, %v1259
        %v1297 = vsub.f32 %v1198, %v1259
        %v1298 = vsub.f32 %v1202, %v1262
        %v1299 = vsub.f32 %v1204, %v1262
        %v1300 = vsub.f32 %v1206, %v1265
        %v1301 = vsub.f32 %v1208, %v1265
        %v1302 = vsub.f32 %v1212, %v1268
        %v1303 = vsub.f32 %v1214, %v1268
        %v1304 = vsub.f32 %v1216, %v1271
        %v1305 = vsub.f32 %v1218, %v1271
        %v1306 = vsub.f32 %v1222, %v1274
        %v1307 = vsub.f32 %v1224, %v1274
        %v1308 = vsub.f32 %v1226, %v1277
        %v1309 = vsub.f32 %v1228, %v1277
        %v1310 = vmul.f32 %v1278, 1.442695
        %v1311 = vpow.pop %v1310
        %v1312 = vmul.f32 %v1279, 1.442695
        %v1313 = vpow.pop %v1312
        %v1314 = vmul.f32 %v1280, 1.442695
        %v1315 = vpow.pop %v1314
        %v1316 = vmul.f32 %v1281, 1.442695
        %v1317 = vpow.pop %v1316
        %v1318 = vmul.f32 %v1282, 1.442695
        %v1319 = vpow.pop %v1318
        %v1320 = vmul.f32 %v1283, 1.442695
        %v1321 = vpow.pop %v1320
        %v1322 = vmul.f32 %v1284, 1.442695
        %v1323 = vpow.pop %v1322
        %v1324 = vmul.f32 %v1285, 1.442695
        %v1325 = vpow.pop %v1324
        %v1326 = vmul.f32 %v1286, 1.442695
        %v1327 = vpow.pop %v1326
        %v1328 = vmul.f32 %v1287, 1.442695
        %v1329 = vpow.pop %v1328
        %v1330 = vmul.f32 %v1288, 1.442695
        %v1331 = vpow.pop %v1330
        %v1332 = vmul.f32 %v1289, 1.442695
        %v1333 = vpow.pop %v1332
        %v1334 = vmul.f32 %v1290, 1.442695
        %v1335 = vpow.pop %v1334
        %v1336 = vmul.f32 %v1291, 1.442695
        %v1337 = vpow.pop %v1336
        %v1338 = vmul.f32 %v1292, 1.442695
        %v1339 = vpow.pop %v1338
        %v1340 = vmul.f32 %v1293, 1.442695
        %v1341 = vpow.pop %v1340
        %v1342 = vmul.f32 %v1294, 1.442695
        %v1343 = vpow.pop %v1342
        %v1344 = vmul.f32 %v1295, 1.442695
        %v1345 = vpow.pop %v1344
        %v1346 = vmul.f32 %v1296, 1.442695
        %v1347 = vpow.pop %v1346
        %v1348 = vmul.f32 %v1297, 1.442695
        %v1349 = vpow.pop %v1348
        %v1350 = vmul.f32 %v1298, 1.442695
        %v1351 = vpow.pop %v1350
        %v1352 = vmul.f32 %v1299, 1.442695
        %v1353 = vpow.pop %v1352
        %v1354 = vmul.f32 %v1300, 1.442695
        %v1355 = vpow.pop %v1354
        %v1356 = vmul.f32 %v1301, 1.442695
        %v1357 = vpow.pop %v1356
        %v1358 = vmul.f32 %v1302, 1.442695
        %v1359 = vpow.pop %v1358
        %v1360 = vmul.f32 %v1303, 1.442695
        %v1361 = vpow.pop %v1360
        %v1362 = vmul.f32 %v1304, 1.442695
        %v1363 = vpow.pop %v1362
        %v1364 = vmul.f32 %v1305, 1.442695
        %v1365 = vpow.pop %v1364
        %v1366 = vmul.f32 %v1306, 1.442695
        %v1367 = vpow.pop %v1366
        %v1368 = vmul.f32 %v1307, 1.442695
        %v1369 = vpow.pop %v1368
        %v1370 = vmul.f32 %v1308, 1.442695
        %v1371 = vpow.pop %v1370
        %v1372 = vmul.f32 %v1309, 1.442695
        %v1373 = vpow.pop %v1372
        %v1374 = vadd.f32 %v1311, %v1313
        %1375 = vadd.xlane.f32.xlu0 %v1374
        %v1376 = vpop.xlane.xlu0 %1375
        %v1377 = vadd.f32 %v1315, %v1317
        %1378 = vadd.xlane.f32.xlu0 %v1377
        %v1379 = vpop.xlane.xlu0 %1378
        %v1380 = vadd.f32 %v1319, %v1321
        %1381 = vadd.xlane.f32.xlu0 %v1380
        %v1382 = vpop.xlane.xlu0 %1381
        %v1383 = vadd.f32 %v1323, %v1325
        %1384 = vadd.xlane.f32.xlu0 %v1383
        %v1385 = vpop.xlane.xlu0 %1384
        %v1386 = vadd.f32 %v1327, %v1329
        %1387 = vadd.xlane.f32.xlu0 %v1386
        %v1388 = vpop.xlane.xlu0 %1387
        %v1389 = vadd.f32 %v1331, %v1333
        %1390 = vadd.xlane.f32.xlu0 %v1389
        %v1391 = vpop.xlane.xlu0 %1390
        %v1392 = vadd.f32 %v1335, %v1337
        %1393 = vadd.xlane.f32.xlu0 %v1392
        %v1394 = vpop.xlane.xlu0 %1393
        %v1395 = vadd.f32 %v1339, %v1341
        %1396 = vadd.xlane.f32.xlu0 %v1395
        %v1397 = vpop.xlane.xlu0 %1396
        %v1398 = vadd.f32 %v1343, %v1345
        %1399 = vadd.xlane.f32.xlu0 %v1398
        %v1400 = vpop.xlane.xlu0 %1399
        %v1401 = vadd.f32 %v1347, %v1349
        %1402 = vadd.xlane.f32.xlu0 %v1401
        %v1403 = vpop.xlane.xlu0 %1402
        %v1404 = vadd.f32 %v1351, %v1353
        %1405 = vadd.xlane.f32.xlu0 %v1404
        %v1406 = vpop.xlane.xlu0 %1405
        %v1407 = vadd.f32 %v1355, %v1357
        %1408 = vadd.xlane.f32.xlu0 %v1407
        %v1409 = vpop.xlane.xlu0 %1408
        %v1410 = vadd.f32 %v1359, %v1361
        %1411 = vadd.xlane.f32.xlu0 %v1410
        %v1412 = vpop.xlane.xlu0 %1411
        %v1413 = vadd.f32 %v1363, %v1365
        %1414 = vadd.xlane.f32.xlu0 %v1413
        %v1415 = vpop.xlane.xlu0 %1414
        %v1416 = vadd.f32 %v1367, %v1369
        %1417 = vadd.xlane.f32.xlu0 %v1416
        %v1418 = vpop.xlane.xlu0 %1417
        %v1419 = vadd.f32 %v1371, %v1373
        %1420 = vadd.xlane.f32.xlu0 %v1419
        %v1421 = vpop.xlane.xlu0 %1420
        %v1422 = vrcp.pop %v1376
        %v1423 = vrcp.pop %v1379
        %v1424 = vrcp.pop %v1382
        %v1425 = vrcp.pop %v1385
        %v1426 = vrcp.pop %v1388
        %v1427 = vrcp.pop %v1391
        %v1428 = vrcp.pop %v1394
        %v1429 = vrcp.pop %v1397
        %v1430 = vrcp.pop %v1400
        %v1431 = vrcp.pop %v1403
        %v1432 = vrcp.pop %v1406
        %v1433 = vrcp.pop %v1409
        %v1434 = vrcp.pop %v1412
        %v1435 = vrcp.pop %v1415
        %v1436 = vrcp.pop %v1418
        %v1437 = vrcp.pop %v1421
        %v1438 = vpack.c.bf16 %v1315, %v1311
        %v1439 = vpack.c.bf16 %v1317, %v1313
        %v1440 = vpack.c.bf16 %v1323, %v1319
        %v1441 = vpack.c.bf16 %v1325, %v1321
        %v1442 = vpack.c.bf16 %v1331, %v1327
        %v1443 = vpack.c.bf16 %v1333, %v1329
        %v1444 = vpack.c.bf16 %v1339, %v1335
        %v1445 = vpack.c.bf16 %v1341, %v1337
        %v1446 = vpack.c.bf16 %v1347, %v1343
        %v1447 = vpack.c.bf16 %v1349, %v1345
        %v1448 = vpack.c.bf16 %v1355, %v1351
        %v1449 = vpack.c.bf16 %v1357, %v1353
        %v1450 = vpack.c.bf16 %v1363, %v1359
        %v1451 = vpack.c.bf16 %v1365, %v1361
        %v1452 = vpack.c.bf16 %v1371, %v1367
        %v1453 = vpack.c.bf16 %v1373, %v1369
        %v1454 = vld [vmem:[#allocation4] sm:$0xff]
        %v1455 = vld [vmem:[#allocation4 + $0x8] sm:$0xff]
        %v1456 = vld [vmem:[#allocation4 + $0x10] sm:$0xff]
        %v1457 = vld [vmem:[#allocation4 + $0x18] sm:$0xff]
        %v1458 = vld [vmem:[#allocation4 + $0x20] sm:$0xff]
        %v1459 = vld [vmem:[#allocation4 + $0x28] sm:$0xff]
        %v1460 = vld [vmem:[#allocation4 + $0x30] sm:$0xff]
        %v1461 = vld [vmem:[#allocation4 + $0x38] sm:$0xff]
        %v1462 = vld [vmem:[#allocation4 + $0x40] sm:$0xff]
        %v1463 = vld [vmem:[#allocation4 + $0x48] sm:$0xff]
        %v1464 = vld [vmem:[#allocation4 + $0x50] sm:$0xff]
        %v1465 = vld [vmem:[#allocation4 + $0x58] sm:$0xff]
        %v1466 = vld [vmem:[#allocation4 + $0x60] sm:$0xff]
        %v1467 = vld [vmem:[#allocation4 + $0x68] sm:$0xff]
        %v1468 = vld [vmem:[#allocation4 + $0x70] sm:$0xff]
        %v1469 = vld [vmem:[#allocation4 + $0x78] sm:$0xff]
        %1470 = vmatprep.subr.bf16.mxu0 0
        %1471 = vmatpush1.bf16.msra.mxu0 %v1454
        %1472 = vmatprep.subr.bf16.mxu0 0
        %1473 = vmatpush1.bf16.msra.mxu0 %v1455
        %1474 = vmatprep.subr.bf16.mxu0 0
        %1475 = vmatpush1.bf16.msra.mxu0 %v1456
        %1476 = vmatprep.subr.bf16.mxu0 0
        %1477 = vmatpush1.bf16.msra.mxu0 %v1457
        %1478 = vmatprep.subr.bf16.mxu0 0
        %1479 = vmatpush1.bf16.msra.mxu0 %v1458
        %1480 = vmatprep.subr.bf16.mxu0 0
        %1481 = vmatpush1.bf16.msra.mxu0 %v1459
        %1482 = vmatprep.subr.bf16.mxu0 0
        %1483 = vmatpush1.bf16.msra.mxu0 %v1460
        %1484 = vmatprep.subr.bf16.mxu0 0
        %1485 = vmatpush1.bf16.msra.mxu0 %v1461
        %1486 = vmatprep.subr.bf16.mxu0 0
        %1487 = vmatpush1.bf16.msra.mxu0 %v1462
        %1488 = vmatprep.subr.bf16.mxu0 0
        %1489 = vmatpush1.bf16.msra.mxu0 %v1463
        %1490 = vmatprep.subr.bf16.mxu0 0
        %1491 = vmatpush1.bf16.msra.mxu0 %v1464
        %1492 = vmatprep.subr.bf16.mxu0 0
        %1493 = vmatpush1.bf16.msra.mxu0 %v1465
        %1494 = vmatprep.subr.bf16.mxu0 0
        %1495 = vmatpush1.bf16.msra.mxu0 %v1466
        %1496 = vmatprep.subr.bf16.mxu0 0
        %1497 = vmatpush1.bf16.msra.mxu0 %v1467
        %1498 = vmatprep.subr.bf16.mxu0 0
        %1499 = vmatpush1.bf16.msra.mxu0 %v1468
        %1500 = vmatprep.subr.bf16.mxu0 0
        %1501 = vmatpush1.bf16.msra.mxu0 %v1469
        %1502 = vmatprep.mubr.bf16.mxu0 %v1439
        %1503 = vmatmul.mubr.bf16.gmra.mrb[0].mxu0 %v1438
        %v1504 = vpop.f32.mrb[0].mxu0
        %v1505 = vadd.f32 0.0, %v1504
        %v1506 = vpop.f32.mrb[0].mxu0
        %v1507 = vpop.f32.mrb[0].mxu0
        %v1508 = vadd.f32 0.0, %v1507
        %v1509 = vpop.f32.mrb[0].mxu0
        %1510 = vmatprep.mubr.bf16.mxu0 %v1441
        %1511 = vmatmul.mubr.bf16.gmra.mrb[0].mxu0 %v1440
        %v1512 = vpop.f32.mrb[0].mxu0
        %v1513 = vadd.f32 0.0, %v1512
        %v1514 = vpop.f32.mrb[0].mxu0
        %v1515 = vpop.f32.mrb[0].mxu0
        %v1516 = vadd.f32 0.0, %v1515
        %v1517 = vpop.f32.mrb[0].mxu0
        %1518 = vmatprep.mubr.bf16.mxu0 %v1443
        %1519 = vmatmul.mubr.bf16.gmra.mrb[0].mxu0 %v1442
        %v1520 = vpop.f32.mrb[0].mxu0
        %v1521 = vadd.f32 0.0, %v1520
        %v1522 = vpop.f32.mrb[0].mxu0
        %v1523 = vpop.f32.mrb[0].mxu0
        %v1524 = vadd.f32 0.0, %v1523
        %v1525 = vpop.f32.mrb[0].mxu0
        %1526 = vmatprep.mubr.bf16.mxu0 %v1445
        %1527 = vmatmul.mubr.bf16.gmra.mrb[0].mxu0 %v1444
        %v1528 = vpop.f32.mrb[0].mxu0
        %v1529 = vadd.f32 0.0, %v1528
        %v1530 = vpop.f32.mrb[0].mxu0
        %v1531 = vpop.f32.mrb[0].mxu0
        %v1532 = vadd.f32 0.0, %v1531
        %v1533 = vpop.f32.mrb[0].mxu0
        %1534 = vmatprep.mubr.bf16.mxu0 %v1447
        %1535 = vmatmul.mubr.bf16.gmra.mrb[0].mxu0 %v1446
        %v1536 = vpop.f32.mrb[0].mxu0
        %v1537 = vadd.f32 0.0, %v1536
        %v1538 = vpop.f32.mrb[0].mxu0
        %v1539 = vpop.f32.mrb[0].mxu0
        %v1540 = vadd.f32 0.0, %v1539
        %v1541 = vpop.f32.mrb[0].mxu0
        %1542 = vmatprep.mubr.bf16.mxu0 %v1449
        %1543 = vmatmul.mubr.bf16.gmra.mrb[0].mxu0 %v1448
        %v1544 = vpop.f32.mrb[0].mxu0
        %v1545 = vadd.f32 0.0, %v1544
        %v1546 = vpop.f32.mrb[0].mxu0
        %v1547 = vpop.f32.mrb[0].mxu0
        %v1548 = vadd.f32 0.0, %v1547
        %v1549 = vpop.f32.mrb[0].mxu0
        %1550 = vmatprep.mubr.bf16.mxu0 %v1451
        %1551 = vmatmul.mubr.bf16.gmra.mrb[0].mxu0 %v1450
        %v1552 = vpop.f32.mrb[0].mxu0
        %v1553 = vadd.f32 0.0, %v1552
        %v1554 = vpop.f32.mrb[0].mxu0
        %v1555 = vpop.f32.mrb[0].mxu0
        %v1556 = vadd.f32 0.0, %v1555
        %v1557 = vpop.f32.mrb[0].mxu0
        %1558 = vmatprep.mubr.bf16.mxu0 %v1453
        %1559 = vmatmul.mubr.bf16.gmra.mrb[0].mxu0 %v1452
        %v1560 = vpop.f32.mrb[0].mxu0
        %v1561 = vadd.f32 0.0, %v1560
        %v1562 = vpop.f32.mrb[0].mxu0
        %v1563 = vpop.f32.mrb[0].mxu0
        %v1564 = vadd.f32 0.0, %v1563
        %v1565 = vpop.f32.mrb[0].mxu0
        %1566 = vdwg.mxu0
        %v1567 = vmul.f32 %v1505, %v1422
        %v1568 = vmul.f32 %v1508, %v1423
        %v1569 = vmul.f32 %v1513, %v1424
        %v1570 = vmul.f32 %v1516, %v1425
        %v1571 = vmul.f32 %v1521, %v1426
        %v1572 = vmul.f32 %v1524, %v1427
        %v1573 = vmul.f32 %v1529, %v1428
        %v1574 = vmul.f32 %v1532, %v1429
        %v1575 = vmul.f32 %v1537, %v1430
        %v1576 = vmul.f32 %v1540, %v1431
        %v1577 = vmul.f32 %v1545, %v1432
        %v1578 = vmul.f32 %v1548, %v1433
        %v1579 = vmul.f32 %v1553, %v1434
        %v1580 = vmul.f32 %v1556, %v1435
        %v1581 = vmul.f32 %v1561, %v1436
        %v1582 = vmul.f32 %v1564, %v1437
        %v1583 = vpack.c.bf16 %v1568, %v1567
        %v1584 = vpack.c.bf16 %v1570, %v1569
        %v1585 = vpack.c.bf16 %v1572, %v1571
        %v1586 = vpack.c.bf16 %v1574, %v1573
        %v1587 = vpack.c.bf16 %v1576, %v1575
        %v1588 = vpack.c.bf16 %v1578, %v1577
        %v1589 = vpack.c.bf16 %v1580, %v1579
        %v1590 = vpack.c.bf16 %v1582, %v1581
        %v1592 = vlaneseq
        %v1593 = vshrl.u32 %v1592, 7
        %v1594 = vsub.s32 0, %v1593
        %v1595 = vrot.slane %v1009, %v1594
        %v1601 = vunpack.c.l.b16 %v1005
        %v1602 = vunpack.c.l.b16 %v1006
        %v1603 = vunpack.c.l.b16 %v1007
        %v1604 = vunpack.c.l.b16 %v1008
        %v1605 = vpack.c.b16 %v1602, %v1601
        %v1606 = vpack.c.b16 %v1604, %v1603
        %v1610 = vsel %vm317, %v1583, 0
        %v1613 = vsel %vm317, %v1584, 0
        %v1616 = vsel %vm317, %v1585, 0
        %v1619 = vsel %vm317, %v1586, 0
        %v1622 = vsel %vm317, %v1587, 0
        %v1625 = vsel %vm317, %v1588, 0
        %v1628 = vsel %vm317, %v1589, 0
        %v1631 = vsel %vm317, %v1590, 0
        %1633 = vmatprep.subr.bf16.mxu0 0
        %1634 = vmatpush1.bf16.msra.mxu0 %v1605
        %1635 = vmatprep.subr.bf16.mxu0 0
        %1636 = vmatpush1.bf16.msra.mxu0 %v1606
        %1637 = vmatprep.subr.bf16.mxu0 0
        %1638 = vmatpush1.bf16.msra.mxu0 0
        %1639 = vmatprep.subr.bf16.mxu0 0
        %1640 = vmatpush1.bf16.msra.mxu0 0
        %1641 = vmatprep.subr.bf16.mxu0 0
        %1642 = vmatpush1.bf16.msra.mxu0 0
        %1643 = vmatprep.subr.bf16.mxu0 0
        %1644 = vmatpush1.bf16.msra.mxu0 0
        %1645 = vmatprep.subr.bf16.mxu0 0
        %1646 = vmatpush1.bf16.msra.mxu0 0
        %1647 = vmatprep.subr.bf16.mxu0 0
        %1648 = vmatpush1.bf16.msra.mxu0 0
        %1649 = vmatprep.subr.bf16.mxu0 0
        %1650 = vmatpush1.bf16.msra.mxu0 0
        %1651 = vmatprep.subr.bf16.mxu0 0
        %1652 = vmatpush1.bf16.msra.mxu0 0
        %1653 = vmatprep.subr.bf16.mxu0 0
        %1654 = vmatpush1.bf16.msra.mxu0 0
        %1655 = vmatprep.subr.bf16.mxu0 0
        %1656 = vmatpush1.bf16.msra.mxu0 0
        %1657 = vmatprep.subr.bf16.mxu0 0
        %1658 = vmatpush1.bf16.msra.mxu0 0
        %1659 = vmatprep.subr.bf16.mxu0 0
        %1660 = vmatpush1.bf16.msra.mxu0 0
        %1661 = vmatprep.subr.bf16.mxu0 0
        %1662 = vmatpush1.bf16.msra.mxu0 0
        %1663 = vmatprep.subr.bf16.mxu0 0
        %1664 = vmatpush1.bf16.msra.mxu0 0
        %1665 = vmatprep.mubr.bf16.mxu0 0
        %1666 = vmatmul.mubr.bf16.gmra.mrb[0].mxu0 %v1610
        %v1667 = vpop.f32.mrb[0].mxu0
        %v1668 = vadd.f32 %v1595, %v1667
        %v1669 = vpop.f32.mrb[0].mxu0
        %v1670 = vpop.f32.mrb[0].mxu0
        %v1671 = vadd.f32 %v1595, %v1670
        %v1672 = vpop.f32.mrb[0].mxu0
        %1673 = vmatprep.mubr.bf16.mxu0 0
        %1674 = vmatmul.mubr.bf16.gmra.mrb[0].mxu0 %v1613
        %v1675 = vpop.f32.mrb[0].mxu0
        %v1676 = vadd.f32 %v1595, %v1675
        %v1677 = vpop.f32.mrb[0].mxu0
        %v1678 = vpop.f32.mrb[0].mxu0
        %v1679 = vadd.f32 %v1595, %v1678
        %v1680 = vpop.f32.mrb[0].mxu0
        %1681 = vmatprep.mubr.bf16.mxu0 0
        %1682 = vmatmul.mubr.bf16.gmra.mrb[0].mxu0 %v1616
        %v1683 = vpop.f32.mrb[0].mxu0
        %v1684 = vadd.f32 %v1595, %v1683
        %v1685 = vpop.f32.mrb[0].mxu0
        %v1686 = vpop.f32.mrb[0].mxu0
        %v1687 = vadd.f32 %v1595, %v1686
        %v1688 = vpop.f32.mrb[0].mxu0
        %1689 = vmatprep.mubr.bf16.mxu0 0
        %1690 = vmatmul.mubr.bf16.gmra.mrb[0].mxu0 %v1619
        %v1691 = vpop.f32.mrb[0].mxu0
        %v1692 = vadd.f32 %v1595, %v1691
        %v1693 = vpop.f32.mrb[0].mxu0
        %v1694 = vpop.f32.mrb[0].mxu0
        %v1695 = vadd.f32 %v1595, %v1694
        %v1696 = vpop.f32.mrb[0].mxu0
        %1697 = vmatprep.mubr.bf16.mxu0 0
        %1698 = vmatmul.mubr.bf16.gmra.mrb[0].mxu0 %v1622
        %v1699 = vpop.f32.mrb[0].mxu0
        %v1700 = vadd.f32 %v1595, %v1699
        %v1701 = vpop.f32.mrb[0].mxu0
        %v1702 = vpop.f32.mrb[0].mxu0
        %v1703 = vadd.f32 %v1595, %v1702
        %v1704 = vpop.f32.mrb[0].mxu0
        %1705 = vmatprep.mubr.bf16.mxu0 0
        %1706 = vmatmul.mubr.bf16.gmra.mrb[0].mxu0 %v1625
        %v1707 = vpop.f32.mrb[0].mxu0
        %v1708 = vadd.f32 %v1595, %v1707
        %v1709 = vpop.f32.mrb[0].mxu0
        %v1710 = vpop.f32.mrb[0].mxu0
        %v1711 = vadd.f32 %v1595, %v1710
        %v1712 = vpop.f32.mrb[0].mxu0
        %1713 = vmatprep.mubr.bf16.mxu0 0
        %1714 = vmatmul.mubr.bf16.gmra.mrb[0].mxu0 %v1628
        %v1715 = vpop.f32.mrb[0].mxu0
        %v1716 = vadd.f32 %v1595, %v1715
        %v1717 = vpop.f32.mrb[0].mxu0
        %v1718 = vpop.f32.mrb[0].mxu0
        %v1719 = vadd.f32 %v1595, %v1718
        %v1720 = vpop.f32.mrb[0].mxu0
        %1721 = vmatprep.mubr.bf16.mxu0 0
        %1722 = vmatmul.mubr.bf16.gmra.mrb[0].mxu0 %v1631
        %v1723 = vpop.f32.mrb[0].mxu0
        %v1724 = vadd.f32 %v1595, %v1723
        %v1725 = vpop.f32.mrb[0].mxu0
        %v1726 = vpop.f32.mrb[0].mxu0
        %v1727 = vadd.f32 %v1595, %v1726
        %v1728 = vpop.f32.mrb[0].mxu0
        %1729 = vdwg.mxu0
        %s1730 = scalar_lea.vmem %s246, %s1016
        %v1731 = vld [vmem:[%s1730] sm:$0xff]
        %v1732 = vld [vmem:[%s1730 + $0x8] sm:$0xff]
        %v1733 = vld [vmem:[%s1730 + $0x10] sm:$0xff]
        %v1734 = vld [vmem:[%s1730 + $0x18] sm:$0xff]
        %v1735 = vld [vmem:[%s1730 + $0x20] sm:$0xff]
        %v1736 = vld [vmem:[%s1730 + $0x28] sm:$0xff]
        %v1737 = vld [vmem:[%s1730 + $0x30] sm:$0xff]
        %v1738 = vld [vmem:[%s1730 + $0x38] sm:$0xff]
        %v1739 = vld [vmem:[%s1730 + $0x40] sm:$0xff]
        %v1740 = vld [vmem:[%s1730 + $0x48] sm:$0xff]
        %v1741 = vld [vmem:[%s1730 + $0x50] sm:$0xff]
        %v1742 = vld [vmem:[%s1730 + $0x58] sm:$0xff]
        %v1743 = vld [vmem:[%s1730 + $0x60] sm:$0xff]
        %v1744 = vld [vmem:[%s1730 + $0x68] sm:$0xff]
        %v1745 = vld [vmem:[%s1730 + $0x70] sm:$0xff]
        %v1746 = vld [vmem:[%s1730 + $0x78] sm:$0xff]
        %v1747 = vadd.f32 %v1668, %v1731
        %v1748 = vadd.f32 %v1671, %v1732
        %v1749 = vadd.f32 %v1676, %v1733
        %v1750 = vadd.f32 %v1679, %v1734
        %v1751 = vadd.f32 %v1684, %v1735
        %v1752 = vadd.f32 %v1687, %v1736
        %v1753 = vadd.f32 %v1692, %v1737
        %v1754 = vadd.f32 %v1695, %v1738
        %v1755 = vadd.f32 %v1700, %v1739
        %v1756 = vadd.f32 %v1703, %v1740
        %v1757 = vadd.f32 %v1708, %v1741
        %v1758 = vadd.f32 %v1711, %v1742
        %v1759 = vadd.f32 %v1716, %v1743
        %v1760 = vadd.f32 %v1719, %v1744
        %v1761 = vadd.f32 %v1724, %v1745
        %v1762 = vadd.f32 %v1727, %v1746
        %s1763 = scalar_lea.vmem %s251, %s1016
        %1764 = vst.msk [vmem:[%s1763] sm:$0xff] %vm317, %v1747
        %1765 = vst.msk [vmem:[%s1763 + $0x8] sm:$0xff] %vm317, %v1748
        %1766 = vst.msk [vmem:[%s1763 + $0x10] sm:$0xff] %vm317, %v1749
        %1767 = vst.msk [vmem:[%s1763 + $0x18] sm:$0xff] %vm317, %v1750
        %1768 = vst.msk [vmem:[%s1763 + $0x20] sm:$0xff] %vm317, %v1751
        %1769 = vst.msk [vmem:[%s1763 + $0x28] sm:$0xff] %vm317, %v1752
        %1770 = vst.msk [vmem:[%s1763 + $0x30] sm:$0xff] %vm317, %v1753
        %1771 = vst.msk [vmem:[%s1763 + $0x38] sm:$0xff] %vm317, %v1754
        %1772 = vst.msk [vmem:[%s1763 + $0x40] sm:$0xff] %vm317, %v1755
        %1773 = vst.msk [vmem:[%s1763 + $0x48] sm:$0xff] %vm317, %v1756
        %1774 = vst.msk [vmem:[%s1763 + $0x50] sm:$0xff] %vm317, %v1757
        %1775 = vst.msk [vmem:[%s1763 + $0x58] sm:$0xff] %vm317, %v1758
        %1776 = vst.msk [vmem:[%s1763 + $0x60] sm:$0xff] %vm317, %v1759
        %1777 = vst.msk [vmem:[%s1763 + $0x68] sm:$0xff] %vm317, %v1760
        %1778 = vst.msk [vmem:[%s1763 + $0x70] sm:$0xff] %vm317, %v1761
        %1779 = vst.msk [vmem:[%s1763 + $0x78] sm:$0xff] %vm317, %v1762
      $region49: #{tpu_custom_call.1} parent=43 // loop_footer
        %s1015 = sadd.s32 1, %s1011
      $region50: #{tpu_custom_call.1} parent=43 // loop_footer_branch
        %1010 = sbr.rel target = $region46
      $region51: #{tpu_custom_call.1} parent=43 // loop_exit
        _
      %p1780 = scmp.lt.s32.totalorder %s17, 5
      %s1781 = scalar_select %p1780, %s17, 5
      %s1782 = smul.addr %s1781, 32
      %s1783 = smul.addr %s1782, 8
      %s1784 = scalar_lea.vmem %s6, %s1783
      // Predicated region
      $region52: #{tpu_custom_call.1} parent=43 // pred_check
        %p1785 = pneg %p166
      $region53: #{tpu_custom_call.1} parent=43 // pred_check_branch
        %1787 = sbr.rel (%p1785) target = $region55
      $region54: #{tpu_custom_call.1} parent=43 // pred_region
        _
      $region55: #{tpu_custom_call.1} parent=43 // pred_fallthru
        _
    $region44: #{tpu_custom_call.1} parent=5 // pred_fallthru
      _
    %p1788 = scmp.le.s32.totalorder 2, %s12
    // Predicated region
    $region56: #{tpu_custom_call.1} parent=5 // pred_check
      %p1789 = pneg %p1788
    $region57: #{tpu_custom_call.1} parent=5 // pred_check_branch
      %1791 = sbr.rel (%p1789) target = $region59
    $region58: #{tpu_custom_call.1} parent=5 // pred_region
      %s1792 = ssub.s32 %s12, 2
      // Predicated region
      $region60: #{tpu_custom_call.1} parent=58 // pred_check
        %p1793 = pneg %p172
      $region61: #{tpu_custom_call.1} parent=58 // pred_check_branch
        %1795 = sbr.rel (%p1793) target = $region63
      $region62: #{tpu_custom_call.1} parent=58 // pred_region
        %p1796 = scmp.lt.s32.totalorder %s18, 5
        %s1797 = scalar_select %p1796, %s18, 5
        %s1798 = smul.addr %s1797, 32
        %s1799 = smul.addr %s1798, 8
        %s1800 = scalar_lea.vmem %s6, %s1799
      $region63: #{tpu_custom_call.1} parent=58 // pred_fallthru
        _
    $region59: #{tpu_custom_call.1} parent=5 // pred_fallthru
      _
  $region6: #{tpu_custom_call.1} parent=0 // loop_footer
    %s16 = sadd.s32 1, %s12
  $region7: #{tpu_custom_call.1} parent=0 // loop_footer_branch
    %11 = sbr.rel target = $region3
  $region8: #{tpu_custom_call.1} parent=0 // loop_exit
    _

</llo_original>
